<compile_context>
chip_gen: v7x
topology: tpu7x:2x2x1
jax: 0.10.0
libtpu: 0.0.40
codegen_flags: <defaults>
</compile_context>

<pallas_src>
import functools

import jax
import jax.numpy as jnp
from jax import lax
from jax.experimental import pallas as pl
from jax.experimental.pallas import tpu as pltpu

LANE = 128  # TODO(synk): at production hidden sizes use 256 on v6e/v7x (2x256 MXU).


def _lstm_kernel(x_ref, wx_ref, wh_ref, b_ref, wo_ref, bo_ref,
                 out_ref, xg_ref, h_ref, c_ref, *, unroll):
    """One (batch block, time block) grid step of the LSTM + head.

    x_ref  : (Tb, Bb, I)      time-major input block (f32)
    wx_ref : (I, 4*Hp)        gate-blocked, lane-aligned, mxu dtype
    wh_ref : (Hp, 4*Hp)       mxu dtype
    b_ref  : (1, 4*Hp)        f32
    wo_ref : (Hp, Op)         mxu dtype, lane-dense Op
    bo_ref : (1, Op)          f32
    out_ref: (Bb, Op)         written only on the last time block
    xg_ref : (Tb, Bb, 4*Hp)   f32 scratch (hoisted x projection, time-major)
    h_ref/c_ref: (Bb, Hp)     f32 scratch, persistent across time blocks
    """
    Tb, Bb, I = x_ref.shape
    Hp = wh_ref.shape[0]
    mxu_dtype = wx_ref.dtype
    t_blk = pl.program_id(1)

    # Fresh h/c at the start of every batch block's time sweep.
    @pl.when(t_blk == 0)
    def _():
        h_ref[...] = jnp.zeros_like(h_ref)
        c_ref[...] = jnp.zeros_like(c_ref)

    # Phase 1: hoisted input projection for the whole time block as ONE MXU
    # matmul, bias folded in once, written to time-major VMEM scratch so the
    # recurrence reads per-step slabs with free leading-axis indexing.
    # (Bb is a multiple of 8, so these reshapes never cross (8,128) tiles.)
    x_flat = x_ref[...].reshape(Tb * Bb, I).astype(mxu_dtype)
    xg = jnp.dot(x_flat, wx_ref[...], preferred_element_type=jnp.float32)
    xg_ref[...] = xg.reshape(Tb, Bb, 4 * Hp) + b_ref[...].reshape(1, 1, 4 * Hp)

    wh = wh_ref[...]  # resident for the recurrence

    def sigmoid(z):
        # 0.5*tanh(0.5*z)+0.5 == sigmoid(z): one EUP op instead of exp + recip.
        return 0.5 * jnp.tanh(0.5 * z) + 0.5

    # Phase 2: sequential recurrence over this time block.  Only h @ Wh remains
    # per step.  fori_loop with modest unroll bounds vreg pressure while keeping
    # scheduler visibility.  All gate math stays f32 (v5e has no bf16 VPU/EUP).
    def step(tt, carry):
        h, c = carry
        gates = xg_ref[tt] + jnp.dot(h.astype(mxu_dtype), wh,
                                     preferred_element_type=jnp.float32)
        # Lane-aligned gate slices (each a full multiple-of-128 lane block).
        i_g = sigmoid(gates[:, 0 * Hp:1 * Hp])
        f_g = sigmoid(gates[:, 1 * Hp:2 * Hp])
        g_g = jnp.tanh(gates[:, 2 * Hp:3 * Hp])
        o_g = sigmoid(gates[:, 3 * Hp:4 * Hp])
        c = f_g * c + i_g * g_g
        h = o_g * jnp.tanh(c)
        return h, c

    h, c = lax.fori_loop(0, Tb, step, (h_ref[...], c_ref[...]),
                         unroll=max(1, min(unroll, Tb)))
    h_ref[...] = h
    c_ref[...] = c

    # Head: Linear(hidden -> output) on the last hidden state, lane-dense store.
    @pl.when(t_blk == pl.num_programs(1) - 1)
    def _():
        out_ref[...] = (jnp.dot(h.astype(wo_ref.dtype), wo_ref[...],
                                preferred_element_type=jnp.float32)
                        + bo_ref[...]).astype(out_ref.dtype)


def pad_lstm_params(params, *, lane=LANE, mxu_dtype=jnp.bfloat16):
    """Re-lay-out weights once at init (NOT per call).

    Each gate occupies a full Hp (= k*lane) lane block; the head is padded to a
    lane-dense Op.  Padded gate pre-activations are exactly 0 every step, so
    padded cells evolve as c_pad <- 0.5*c_pad (stays 0), h_pad <- 0.5*tanh(0)=0,
    i.e. the padding never contaminates results.  MXU operands are cast to
    `mxu_dtype` (use jnp.float32 on v5e or for bit-tight checks).
    """
    wx, wh, b, wo, bo = params
    in_size, hidden = wx.shape[0], wh.shape[0]
    out_size = wo.shape[1]
    Hp = -(-hidden // lane) * lane
    Op = -(-out_size // lane) * lane
    ph, po = Hp - hidden, Op - out_size

    wx_p = jnp.pad(wx.reshape(in_size, 4, hidden),
                   ((0, 0), (0, 0), (0, ph))).reshape(in_size, 4 * Hp)
    wh_p = jnp.pad(wh.reshape(hidden, 4, hidden),
                   ((0, ph), (0, 0), (0, ph))).reshape(Hp, 4 * Hp)
    b_p = jnp.pad(b.reshape(1, 4, hidden),
                  ((0, 0), (0, 0), (0, ph))).reshape(1, 4 * Hp)
    wo_p = jnp.pad(wo, ((0, ph), (0, po)))
    bo_p = jnp.pad(bo, ((0, 0), (0, po)))
    return (wx_p.astype(mxu_dtype), wh_p.astype(mxu_dtype),
            b_p.astype(jnp.float32), wo_p.astype(mxu_dtype),
            bo_p.astype(jnp.float32))


def lstm_model_forward(input_seq, padded_params, output_size, *,
                       time_block=16, batch_blocks=1, unroll=4):
    """input_seq: (batch, seq_len, input_size) f32 -> (batch, output_size) f32.

    `padded_params` comes from pad_lstm_params (call once at init).
    On v7x set batch_blocks=2 to run independent batch halves on the 2 TCs.
    """
    wx_p, wh_p, b_p, wo_p, bo_p = padded_params
    batch, seq_len, input_size = input_seq.shape
    Hp = wh_p.shape[0]
    Op = wo_p.shape[1]
    mxu_dtype = wx_p.dtype

    # Per-core batch tile: sublane-aligned (multiple of 8 rows for f32 math).
    per_block = -(-batch // batch_blocks)
    Bb = max(8, -(-per_block // 8) * 8)
    batch_pad = Bb * batch_blocks

    # Time block: largest divisor of seq_len not exceeding `time_block`
    # (sequence zero-padding is NOT semantically inert for an LSTM).
    Tb = 1
    for d in range(1, min(time_block, seq_len) + 1):
        if seq_len % d == 0:
            Tb = d
    nt = seq_len // Tb

    # Time-major, batch-padded input so each grid step streams a (Tb, Bb, I)
    # block and the kernel's per-step access is leading-axis indexed.
    # TODO(synk): at production, keep/stream x time-major upstream so this
    # single extra HBM pass over x disappears.
    x_tm = jnp.transpose(input_seq, (1, 0, 2))
    x_tm = jnp.pad(x_tm, ((0, 0), (0, batch_pad - batch), (0, 0)))

    in_specs = [
        pl.BlockSpec((Tb, Bb, input_size), lambda bi, ti: (ti, bi, 0)),
        pl.BlockSpec(wx_p.shape, lambda bi, ti: (0, 0)),
        pl.BlockSpec(wh_p.shape, lambda bi, ti: (0, 0)),
        pl.BlockSpec(b_p.shape, lambda bi, ti: (0, 0)),
        pl.BlockSpec(wo_p.shape, lambda bi, ti: (0, 0)),
        pl.BlockSpec(bo_p.shape, lambda bi, ti: (0, 0)),
    ]
    out_specs = pl.BlockSpec((Bb, Op), lambda bi, ti: (bi, 0))
    scratch_shapes = [
        pltpu.VMEM((Tb, Bb, 4 * Hp), jnp.float32),   # hoisted x projection
        pltpu.VMEM((Bb, Hp), jnp.float32),           # h (persistent carry)
        pltpu.VMEM((Bb, Hp), jnp.float32),           # c (persistent carry)
    ]

    # Scoped-VMEM budget from the actual per-step footprint (+2x headroom),
    # capped below the smallest physical VMEM (v7x: 64 MiB per TC).
    itm = jnp.dtype(mxu_dtype).itemsize
    w_bytes = (int(wx_p.size + wh_p.size + wo_p.size) * itm
               + int(b_p.size + bo_p.size) * 4)
    blk_bytes = Tb * Bb * input_size * 4 + Bb * Op * 4
    scratch_bytes = (Tb * Bb * 4 * Hp + 2 * Bb * Hp) * 4
    vmem_limit = int(min(64 * 1024 * 1024,
                         max(4 * 1024 * 1024,
                             2 * (w_bytes + 2 * blk_bytes + scratch_bytes))))

    flops = (2 * seq_len * batch_pad * input_size * 4 * Hp
             + 2 * seq_len * batch_pad * Hp * 4 * Hp
             + 2 * batch_pad * Hp * Op)
    cost = pl.CostEstimate(
        flops=int(flops),
        transcendentals=int(5 * seq_len * batch_pad * Hp),
        bytes_accessed=int(x_tm.size * 4 + w_bytes + batch_pad * Op * 4))

    out = pl.pallas_call(
        functools.partial(_lstm_kernel, unroll=unroll),
        out_shape=jax.ShapeDtypeStruct((batch_pad, Op), jnp.float32),
        grid=(batch_blocks, nt),
        in_specs=in_specs,
        out_specs=out_specs,
        scratch_shapes=scratch_shapes,
        compiler_params=pltpu.CompilerParams(
            dimension_semantics=("parallel", "arbitrary"),
            vmem_limit_bytes=vmem_limit),
        cost_estimate=cost,
    )(x_tm, wx_p, wh_p, b_p, wo_p, bo_p)

    return out[:batch, :output_size]


def init_params(key, input_size, hidden, output_size):
    k1, k2, k3, k4, k5 = jax.random.split(key, 5)
    scale = 0.1
    wx = scale * jax.random.normal(k1, (input_size, 4 * hidden), jnp.float32)
    wh = scale * jax.random.normal(k2, (hidden, 4 * hidden), jnp.float32)
    b = scale * jax.random.normal(k3, (1, 4 * hidden), jnp.float32)
    wo = scale * jax.random.normal(k4, (hidden, output_size), jnp.float32)
    bo = scale * jax.random.normal(k5, (1, output_size), jnp.float32)
    return wx, wh, b, wo, bo


def reference_forward(input_seq, params):
    """Pure-JAX f32 reference of the same LSTM + Linear forward."""
    wx, wh, b, wo, bo = params
    batch = input_seq.shape[0]
    hidden = wh.shape[0]
    h = jnp.zeros((batch, hidden), jnp.float32)
    c = jnp.zeros((batch, hidden), jnp.float32)
    for t in range(input_seq.shape[1]):
        gates = input_seq[:, t] @ wx + h @ wh + b
        i_g = jax.nn.sigmoid(gates[:, 0 * hidden:1 * hidden])
        f_g = jax.nn.sigmoid(gates[:, 1 * hidden:2 * hidden])
        g_g = jnp.tanh(gates[:, 2 * hidden:3 * hidden])
        o_g = jax.nn.sigmoid(gates[:, 3 * hidden:4 * hidden])
        c = f_g * c + i_g * g_g
        h = o_g * jnp.tanh(c)
    return h @ wo + bo


if __name__ == "__main__":
    batch, seq_len, input_size = 2, 8, 4
    hidden, output_size = 32, 4

    key = jax.random.PRNGKey(0)
    kx, kp = jax.random.split(key)
    x = jax.random.normal(kx, (batch, seq_len, input_size), jnp.float32)
    params = init_params(kp, input_size, hidden, output_size)
    ref = reference_forward(x, params)

    # f32 MXU operands: tight agreement with the reference; Tb=4 exercises the
    # persistent h/c scratch carry across two time blocks.
    params_f32 = pad_lstm_params(params, mxu_dtype=jnp.float32)
    out_f32 = jax.block_until_ready(
        lstm_model_forward(x, params_f32, output_size, time_block=4, unroll=4))
    assert out_f32.shape == (batch, output_size)
    assert jnp.allclose(out_f32, ref, atol=1e-4, rtol=1e-4), (out_f32, ref)

    # bf16 MXU operands (v6e/v7x fast path; gate math stays f32) and a
    # 2-block "parallel" batch axis (the v7x two-TensorCore split).
    params_bf16 = pad_lstm_params(params, mxu_dtype=jnp.bfloat16)
    out_bf16 = jax.block_until_ready(
        lstm_model_forward(x, params_bf16, output_size, time_block=4,
                           batch_blocks=2, unroll=2))
    assert out_bf16.shape == (batch, output_size)
    assert jnp.allclose(out_bf16, ref, atol=5e-2, rtol=5e-2), (out_bf16, ref)

    print("KERNEL_OK")
</pallas_src>

<mosaic_0001>
module attributes {stable_mosaic.version = 11 : i64} {
  func.func @_lstm_kernel(%arg0: i32, %arg1: i32, %arg2: memref<4x8x4xf32, #tpu.memory_space<vmem>>, %arg3: memref<4x512xf32, #tpu.memory_space<vmem>>, %arg4: memref<128x512xf32, #tpu.memory_space<vmem>>, %arg5: memref<1x512xf32, #tpu.memory_space<vmem>>, %arg6: memref<128x128xf32, #tpu.memory_space<vmem>>, %arg7: memref<1x128xf32, #tpu.memory_space<vmem>>, %arg8: memref<8x128xf32, #tpu.memory_space<vmem>>, %arg9: memref<4x8x512xf32, #tpu.memory_space<vmem>>, %arg10: memref<8x128xf32, #tpu.memory_space<vmem>>, %arg11: memref<8x128xf32, #tpu.memory_space<vmem>>) attributes {dimension_semantics = [#tpu.dimension_semantics<parallel>, #tpu.dimension_semantics<arbitrary>], iteration_bounds = array<i64: 1, 2>, scalar_prefetch = 0 : i64, scratch_operands = 3 : i64, tpu.core_type = #tpu.core_type<tc>, window_params = [{transform_indices = @transform_0, window_bounds = array<i64: 4, 8, 4>}, {pipeline_mode = #tpu.pipeline_mode<synchronous>, transform_indices = @transform_1, window_bounds = array<i64: 4, 512>}, {pipeline_mode = #tpu.pipeline_mode<synchronous>, transform_indices = @transform_2, window_bounds = array<i64: 128, 512>}, {pipeline_mode = #tpu.pipeline_mode<synchronous>, transform_indices = @transform_3, window_bounds = array<i64: 1, 512>}, {pipeline_mode = #tpu.pipeline_mode<synchronous>, transform_indices = @transform_4, window_bounds = array<i64: 128, 128>}, {pipeline_mode = #tpu.pipeline_mode<synchronous>, transform_indices = @transform_5, window_bounds = array<i64: 1, 128>}, {transform_indices = @transform_6, window_bounds = array<i64: 8, 128>}]} {
    %c0_i32 = arith.constant 0 : i32
    %0 = arith.cmpi eq, %arg1, %c0_i32 : i32
    %1 = arith.extui %0 : i1 to i32
    %c0_i32_0 = arith.constant 0 : i32
    %2 = arith.cmpi ne, %1, %c0_i32_0 : i32
    scf.if %2 {
      %cst_71 = arith.constant 0.000000e+00 : f32
      %165 = vector.broadcast %cst_71 : f32 to vector<8x128xf32>
      %c0_72 = arith.constant 0 : index
      %c0_73 = arith.constant 0 : index
      %166 = vector.load %arg10[%c0_72, %c0_73] : memref<8x128xf32, #tpu.memory_space<vmem>>, vector<8x128xf32>
      tpu.vector_store %arg10[%c0_72, %c0_73], %165 {strides = array<i32>} : memref<8x128xf32, #tpu.memory_space<vmem>>, vector<8x128xf32>,
      %cst_74 = arith.constant 0.000000e+00 : f32
      %167 = vector.broadcast %cst_74 : f32 to vector<8x128xf32>
      %c0_75 = arith.constant 0 : index
      %c0_76 = arith.constant 0 : index
      %168 = vector.load %arg11[%c0_75, %c0_76] : memref<8x128xf32, #tpu.memory_space<vmem>>, vector<8x128xf32>
      tpu.vector_store %arg11[%c0_75, %c0_76], %167 {strides = array<i32>} : memref<8x128xf32, #tpu.memory_space<vmem>>, vector<8x128xf32>,
    } else {
    }
    %c0 = arith.constant 0 : index
    %c0_1 = arith.constant 0 : index
    %c0_2 = arith.constant 0 : index
    %3 = vector.load %arg2[%c0, %c0_1, %c0_2] : memref<4x8x4xf32, #tpu.memory_space<vmem>>, vector<4x8x4xf32>
    %4 = vector.shape_cast %3 : vector<4x8x4xf32> to vector<32x4xf32>
    %c0_3 = arith.constant 0 : index
    %c0_4 = arith.constant 0 : index
    %5 = vector.load %arg3[%c0_3, %c0_4] : memref<4x512xf32, #tpu.memory_space<vmem>>, vector<4x512xf32>
    %cst = arith.constant dense<0.000000e+00> : vector<32x512xf32>
    %6 = tpu.matmul %4, %5, %cst {dimension_numbers = #tpu.dot_dimension_numbers<[1], [0], [0], [1], [0, 0, 1, 1], [], []>} : vector<32x4xf32>, vector<4x512xf32>, vector<32x512xf32> -> vector<32x512xf32>
    %7 = vector.shape_cast %6 : vector<32x512xf32> to vector<4x8x512xf32>
    %c0_5 = arith.constant 0 : index
    %c0_6 = arith.constant 0 : index
    %8 = vector.load %arg5[%c0_5, %c0_6] : memref<1x512xf32, #tpu.memory_space<vmem>>, vector<1x512xf32>
    %9 = vector.shape_cast %8 : vector<1x512xf32> to vector<1x1x512xf32>
    %10 = vector.broadcast %9 : vector<1x1x512xf32> to vector<4x8x512xf32>
    %11 = arith.addf %7, %10 : vector<4x8x512xf32>
    %c0_7 = arith.constant 0 : index
    %c0_8 = arith.constant 0 : index
    %c0_9 = arith.constant 0 : index
    %12 = vector.load %arg9[%c0_7, %c0_8, %c0_9] : memref<4x8x512xf32, #tpu.memory_space<vmem>>, vector<4x8x512xf32>
    tpu.vector_store %arg9[%c0_7, %c0_8, %c0_9], %11 {strides = array<i32>} : memref<4x8x512xf32, #tpu.memory_space<vmem>>, vector<4x8x512xf32>,
    %c0_10 = arith.constant 0 : index
    %c0_11 = arith.constant 0 : index
    %13 = vector.load %arg4[%c0_10, %c0_11] : memref<128x512xf32, #tpu.memory_space<vmem>>, vector<128x512xf32>
    %c0_12 = arith.constant 0 : index
    %c0_13 = arith.constant 0 : index
    %14 = vector.load %arg10[%c0_12, %c0_13] : memref<8x128xf32, #tpu.memory_space<vmem>>, vector<8x128xf32>
    %c0_14 = arith.constant 0 : index
    %c0_15 = arith.constant 0 : index
    %15 = vector.load %arg11[%c0_14, %c0_15] : memref<8x128xf32, #tpu.memory_space<vmem>>, vector<8x128xf32>
    %c0_i32_16 = arith.constant 0 : i32
    %16 = arith.index_cast %c0_i32_16 : i32 to index
    %c0_17 = arith.constant 0 : index
    %c0_18 = arith.constant 0 : index
    %17 = vector.load %arg9[%16, %c0_17, %c0_18] : memref<4x8x512xf32, #tpu.memory_space<vmem>>, vector<1x8x512xf32>
    %18 = vector.shape_cast %17 : vector<1x8x512xf32> to vector<8x512xf32>
    %cst_19 = arith.constant dense<0.000000e+00> : vector<8x512xf32>
    %19 = tpu.matmul %14, %13, %cst_19 {dimension_numbers = #tpu.dot_dimension_numbers<[1], [0], [0], [1], [0, 0, 1, 1], [], []>} : vector<8x128xf32>, vector<128x512xf32>, vector<8x512xf32> -> vector<8x512xf32>
    %20 = arith.addf %18, %19 : vector<8x512xf32>
    %21 = vector.extract_strided_slice %20 {offsets = [0, 0], sizes = [8, 128], strides = [1, 1]} : vector<8x512xf32> to vector<8x128xf32>
    %cst_20 = arith.constant 5.000000e-01 : f32
    %22 = vector.broadcast %cst_20 : f32 to vector<8x128xf32>
    %23 = arith.mulf %22, %21 : vector<8x128xf32>
    %24 = math.tanh %23 : vector<8x128xf32>
    %cst_21 = arith.constant 5.000000e-01 : f32
    %25 = vector.broadcast %cst_21 : f32 to vector<8x128xf32>
    %26 = arith.mulf %25, %24 : vector<8x128xf32>
    %cst_22 = arith.constant 5.000000e-01 : f32
    %27 = vector.broadcast %cst_22 : f32 to vector<8x128xf32>
    %28 = arith.addf %26, %27 : vector<8x128xf32>
    %29 = vector.extract_strided_slice %20 {offsets = [0, 128], sizes = [8, 128], strides = [1, 1]} : vector<8x512xf32> to vector<8x128xf32>
    %cst_23 = arith.constant 5.000000e-01 : f32
    %30 = vector.broadcast %cst_23 : f32 to vector<8x128xf32>
    %31 = arith.mulf %30, %29 : vector<8x128xf32>
    %32 = math.tanh %31 : vector<8x128xf32>
    %cst_24 = arith.constant 5.000000e-01 : f32
    %33 = vector.broadcast %cst_24 : f32 to vector<8x128xf32>
    %34 = arith.mulf %33, %32 : vector<8x128xf32>
    %cst_25 = arith.constant 5.000000e-01 : f32
    %35 = vector.broadcast %cst_25 : f32 to vector<8x128xf32>
    %36 = arith.addf %34, %35 : vector<8x128xf32>
    %37 = vector.extract_strided_slice %20 {offsets = [0, 256], sizes = [8, 128], strides = [1, 1]} : vector<8x512xf32> to vector<8x128xf32>
    %38 = math.tanh %37 : vector<8x128xf32>
    %39 = vector.extract_strided_slice %20 {offsets = [0, 384], sizes = [8, 128], strides = [1, 1]} : vector<8x512xf32> to vector<8x128xf32>
    %cst_26 = arith.constant 5.000000e-01 : f32
    %40 = vector.broadcast %cst_26 : f32 to vector<8x128xf32>
    %41 = arith.mulf %40, %39 : vector<8x128xf32>
    %42 = math.tanh %41 : vector<8x128xf32>
    %cst_27 = arith.constant 5.000000e-01 : f32
    %43 = vector.broadcast %cst_27 : f32 to vector<8x128xf32>
    %44 = arith.mulf %43, %42 : vector<8x128xf32>
    %cst_28 = arith.constant 5.000000e-01 : f32
    %45 = vector.broadcast %cst_28 : f32 to vector<8x128xf32>
    %46 = arith.addf %44, %45 : vector<8x128xf32>
    %47 = arith.mulf %36, %15 : vector<8x128xf32>
    %48 = arith.mulf %28, %38 : vector<8x128xf32>
    %49 = arith.addf %47, %48 : vector<8x128xf32>
    %50 = math.tanh %49 : vector<8x128xf32>
    %51 = arith.mulf %46, %50 : vector<8x128xf32>
    %c1_i32 = arith.constant 1 : i32
    %52 = arith.index_cast %c1_i32 : i32 to index
    %c0_29 = arith.constant 0 : index
    %c0_30 = arith.constant 0 : index
    %53 = vector.load %arg9[%52, %c0_29, %c0_30] : memref<4x8x512xf32, #tpu.memory_space<vmem>>, vector<1x8x512xf32>
    %54 = vector.shape_cast %53 : vector<1x8x512xf32> to vector<8x512xf32>
    %cst_31 = arith.constant dense<0.000000e+00> : vector<8x512xf32>
    %55 = tpu.matmul %51, %13, %cst_31 {dimension_numbers = #tpu.dot_dimension_numbers<[1], [0], [0], [1], [0, 0, 1, 1], [], []>} : vector<8x128xf32>, vector<128x512xf32>, vector<8x512xf32> -> vector<8x512xf32>
    %56 = arith.addf %54, %55 : vector<8x512xf32>
    %57 = vector.extract_strided_slice %56 {offsets = [0, 0], sizes = [8, 128], strides = [1, 1]} : vector<8x512xf32> to vector<8x128xf32>
    %cst_32 = arith.constant 5.000000e-01 : f32
    %58 = vector.broadcast %cst_32 : f32 to vector<8x128xf32>
    %59 = arith.mulf %58, %57 : vector<8x128xf32>
    %60 = math.tanh %59 : vector<8x128xf32>
    %cst_33 = arith.constant 5.000000e-01 : f32
    %61 = vector.broadcast %cst_33 : f32 to vector<8x128xf32>
    %62 = arith.mulf %61, %60 : vector<8x128xf32>
    %cst_34 = arith.constant 5.000000e-01 : f32
    %63 = vector.broadcast %cst_34 : f32 to vector<8x128xf32>
    %64 = arith.addf %62, %63 : vector<8x128xf32>
    %65 = vector.extract_strided_slice %56 {offsets = [0, 128], sizes = [8, 128], strides = [1, 1]} : vector<8x512xf32> to vector<8x128xf32>
    %cst_35 = arith.constant 5.000000e-01 : f32
    %66 = vector.broadcast %cst_35 : f32 to vector<8x128xf32>
    %67 = arith.mulf %66, %65 : vector<8x128xf32>
    %68 = math.tanh %67 : vector<8x128xf32>
    %cst_36 = arith.constant 5.000000e-01 : f32
    %69 = vector.broadcast %cst_36 : f32 to vector<8x128xf32>
    %70 = arith.mulf %69, %68 : vector<8x128xf32>
    %cst_37 = arith.constant 5.000000e-01 : f32
    %71 = vector.broadcast %cst_37 : f32 to vector<8x128xf32>
    %72 = arith.addf %70, %71 : vector<8x128xf32>
    %73 = vector.extract_strided_slice %56 {offsets = [0, 256], sizes = [8, 128], strides = [1, 1]} : vector<8x512xf32> to vector<8x128xf32>
    %74 = math.tanh %73 : vector<8x128xf32>
    %75 = vector.extract_strided_slice %56 {offsets = [0, 384], sizes = [8, 128], strides = [1, 1]} : vector<8x512xf32> to vector<8x128xf32>
    %cst_38 = arith.constant 5.000000e-01 : f32
    %76 = vector.broadcast %cst_38 : f32 to vector<8x128xf32>
    %77 = arith.mulf %76, %75 : vector<8x128xf32>
    %78 = math.tanh %77 : vector<8x128xf32>
    %cst_39 = arith.constant 5.000000e-01 : f32
    %79 = vector.broadcast %cst_39 : f32 to vector<8x128xf32>
    %80 = arith.mulf %79, %78 : vector<8x128xf32>
    %cst_40 = arith.constant 5.000000e-01 : f32
    %81 = vector.broadcast %cst_40 : f32 to vector<8x128xf32>
    %82 = arith.addf %80, %81 : vector<8x128xf32>
    %83 = arith.mulf %72, %49 : vector<8x128xf32>
    %84 = arith.mulf %64, %74 : vector<8x128xf32>
    %85 = arith.addf %83, %84 : vector<8x128xf32>
    %86 = math.tanh %85 : vector<8x128xf32>
    %87 = arith.mulf %82, %86 : vector<8x128xf32>
    %c2_i32 = arith.constant 2 : i32
    %88 = arith.index_cast %c2_i32 : i32 to index
    %c0_41 = arith.constant 0 : index
    %c0_42 = arith.constant 0 : index
    %89 = vector.load %arg9[%88, %c0_41, %c0_42] : memref<4x8x512xf32, #tpu.memory_space<vmem>>, vector<1x8x512xf32>
    %90 = vector.shape_cast %89 : vector<1x8x512xf32> to vector<8x512xf32>
    %cst_43 = arith.constant dense<0.000000e+00> : vector<8x512xf32>
    %91 = tpu.matmul %87, %13, %cst_43 {dimension_numbers = #tpu.dot_dimension_numbers<[1], [0], [0], [1], [0, 0, 1, 1], [], []>} : vector<8x128xf32>, vector<128x512xf32>, vector<8x512xf32> -> vector<8x512xf32>
    %92 = arith.addf %90, %91 : vector<8x512xf32>
    %93 = vector.extract_strided_slice %92 {offsets = [0, 0], sizes = [8, 128], strides = [1, 1]} : vector<8x512xf32> to vector<8x128xf32>
    %cst_44 = arith.constant 5.000000e-01 : f32
    %94 = vector.broadcast %cst_44 : f32 to vector<8x128xf32>
    %95 = arith.mulf %94, %93 : vector<8x128xf32>
    %96 = math.tanh %95 : vector<8x128xf32>
    %cst_45 = arith.constant 5.000000e-01 : f32
    %97 = vector.broadcast %cst_45 : f32 to vector<8x128xf32>
    %98 = arith.mulf %97, %96 : vector<8x128xf32>
    %cst_46 = arith.constant 5.000000e-01 : f32
    %99 = vector.broadcast %cst_46 : f32 to vector<8x128xf32>
    %100 = arith.addf %98, %99 : vector<8x128xf32>
    %101 = vector.extract_strided_slice %92 {offsets = [0, 128], sizes = [8, 128], strides = [1, 1]} : vector<8x512xf32> to vector<8x128xf32>
    %cst_47 = arith.constant 5.000000e-01 : f32
    %102 = vector.broadcast %cst_47 : f32 to vector<8x128xf32>
    %103 = arith.mulf %102, %101 : vector<8x128xf32>
    %104 = math.tanh %103 : vector<8x128xf32>
    %cst_48 = arith.constant 5.000000e-01 : f32
    %105 = vector.broadcast %cst_48 : f32 to vector<8x128xf32>
    %106 = arith.mulf %105, %104 : vector<8x128xf32>
    %cst_49 = arith.constant 5.000000e-01 : f32
    %107 = vector.broadcast %cst_49 : f32 to vector<8x128xf32>
    %108 = arith.addf %106, %107 : vector<8x128xf32>
    %109 = vector.extract_strided_slice %92 {offsets = [0, 256], sizes = [8, 128], strides = [1, 1]} : vector<8x512xf32> to vector<8x128xf32>
    %110 = math.tanh %109 : vector<8x128xf32>
    %111 = vector.extract_strided_slice %92 {offsets = [0, 384], sizes = [8, 128], strides = [1, 1]} : vector<8x512xf32> to vector<8x128xf32>
    %cst_50 = arith.constant 5.000000e-01 : f32
    %112 = vector.broadcast %cst_50 : f32 to vector<8x128xf32>
    %113 = arith.mulf %112, %111 : vector<8x128xf32>
    %114 = math.tanh %113 : vector<8x128xf32>
    %cst_51 = arith.constant 5.000000e-01 : f32
    %115 = vector.broadcast %cst_51 : f32 to vector<8x128xf32>
    %116 = arith.mulf %115, %114 : vector<8x128xf32>
    %cst_52 = arith.constant 5.000000e-01 : f32
    %117 = vector.broadcast %cst_52 : f32 to vector<8x128xf32>
    %118 = arith.addf %116, %117 : vector<8x128xf32>
    %119 = arith.mulf %108, %85 : vector<8x128xf32>
    %120 = arith.mulf %100, %110 : vector<8x128xf32>
    %121 = arith.addf %119, %120 : vector<8x128xf32>
    %122 = math.tanh %121 : vector<8x128xf32>
    %123 = arith.mulf %118, %122 : vector<8x128xf32>
    %c3_i32 = arith.constant 3 : i32
    %124 = arith.index_cast %c3_i32 : i32 to index
    %c0_53 = arith.constant 0 : index
    %c0_54 = arith.constant 0 : index
    %125 = vector.load %arg9[%124, %c0_53, %c0_54] : memref<4x8x512xf32, #tpu.memory_space<vmem>>, vector<1x8x512xf32>
    %126 = vector.shape_cast %125 : vector<1x8x512xf32> to vector<8x512xf32>
    %cst_55 = arith.constant dense<0.000000e+00> : vector<8x512xf32>
    %127 = tpu.matmul %123, %13, %cst_55 {dimension_numbers = #tpu.dot_dimension_numbers<[1], [0], [0], [1], [0, 0, 1, 1], [], []>} : vector<8x128xf32>, vector<128x512xf32>, vector<8x512xf32> -> vector<8x512xf32>
    %128 = arith.addf %126, %127 : vector<8x512xf32>
    %129 = vector.extract_strided_slice %128 {offsets = [0, 0], sizes = [8, 128], strides = [1, 1]} : vector<8x512xf32> to vector<8x128xf32>
    %cst_56 = arith.constant 5.000000e-01 : f32
    %130 = vector.broadcast %cst_56 : f32 to vector<8x128xf32>
    %131 = arith.mulf %130, %129 : vector<8x128xf32>
    %132 = math.tanh %131 : vector<8x128xf32>
    %cst_57 = arith.constant 5.000000e-01 : f32
    %133 = vector.broadcast %cst_57 : f32 to vector<8x128xf32>
    %134 = arith.mulf %133, %132 : vector<8x128xf32>
    %cst_58 = arith.constant 5.000000e-01 : f32
    %135 = vector.broadcast %cst_58 : f32 to vector<8x128xf32>
    %136 = arith.addf %134, %135 : vector<8x128xf32>
    %137 = vector.extract_strided_slice %128 {offsets = [0, 128], sizes = [8, 128], strides = [1, 1]} : vector<8x512xf32> to vector<8x128xf32>
    %cst_59 = arith.constant 5.000000e-01 : f32
    %138 = vector.broadcast %cst_59 : f32 to vector<8x128xf32>
    %139 = arith.mulf %138, %137 : vector<8x128xf32>
    %140 = math.tanh %139 : vector<8x128xf32>
    %cst_60 = arith.constant 5.000000e-01 : f32
    %141 = vector.broadcast %cst_60 : f32 to vector<8x128xf32>
    %142 = arith.mulf %141, %140 : vector<8x128xf32>
    %cst_61 = arith.constant 5.000000e-01 : f32
    %143 = vector.broadcast %cst_61 : f32 to vector<8x128xf32>
    %144 = arith.addf %142, %143 : vector<8x128xf32>
    %145 = vector.extract_strided_slice %128 {offsets = [0, 256], sizes = [8, 128], strides = [1, 1]} : vector<8x512xf32> to vector<8x128xf32>
    %146 = math.tanh %145 : vector<8x128xf32>
    %147 = vector.extract_strided_slice %128 {offsets = [0, 384], sizes = [8, 128], strides = [1, 1]} : vector<8x512xf32> to vector<8x128xf32>
    %cst_62 = arith.constant 5.000000e-01 : f32
    %148 = vector.broadcast %cst_62 : f32 to vector<8x128xf32>
    %149 = arith.mulf %148, %147 : vector<8x128xf32>
    %150 = math.tanh %149 : vector<8x128xf32>
    %cst_63 = arith.constant 5.000000e-01 : f32
    %151 = vector.broadcast %cst_63 : f32 to vector<8x128xf32>
    %152 = arith.mulf %151, %150 : vector<8x128xf32>
    %cst_64 = arith.constant 5.000000e-01 : f32
    %153 = vector.broadcast %cst_64 : f32 to vector<8x128xf32>
    %154 = arith.addf %152, %153 : vector<8x128xf32>
    %155 = arith.mulf %144, %121 : vector<8x128xf32>
    %156 = arith.mulf %136, %146 : vector<8x128xf32>
    %157 = arith.addf %155, %156 : vector<8x128xf32>
    %158 = math.tanh %157 : vector<8x128xf32>
    %159 = arith.mulf %154, %158 : vector<8x128xf32>
    %c4_i32 = arith.constant 4 : i32
    %c0_65 = arith.constant 0 : index
    %c0_66 = arith.constant 0 : index
    %160 = vector.load %arg10[%c0_65, %c0_66] : memref<8x128xf32, #tpu.memory_space<vmem>>, vector<8x128xf32>
    tpu.vector_store %arg10[%c0_65, %c0_66], %159 {strides = array<i32>} : memref<8x128xf32, #tpu.memory_space<vmem>>, vector<8x128xf32>,
    %c0_67 = arith.constant 0 : index
    %c0_68 = arith.constant 0 : index
    %161 = vector.load %arg11[%c0_67, %c0_68] : memref<8x128xf32, #tpu.memory_space<vmem>>, vector<8x128xf32>
    tpu.vector_store %arg11[%c0_67, %c0_68], %157 {strides = array<i32>} : memref<8x128xf32, #tpu.memory_space<vmem>>, vector<8x128xf32>,
    %c1_i32_69 = arith.constant 1 : i32
    %162 = arith.cmpi eq, %arg1, %c1_i32_69 : i32
    %163 = arith.extui %162 : i1 to i32
    %c0_i32_70 = arith.constant 0 : i32
    %164 = arith.cmpi ne, %163, %c0_i32_70 : i32
    scf.if %164 {
      %c0_71 = arith.constant 0 : index
      %c0_72 = arith.constant 0 : index
      %165 = vector.load %arg6[%c0_71, %c0_72] : memref<128x128xf32, #tpu.memory_space<vmem>>, vector<128x128xf32>
      %cst_73 = arith.constant dense<0.000000e+00> : vector<8x128xf32>
      %166 = tpu.matmul %159, %165, %cst_73 {dimension_numbers = #tpu.dot_dimension_numbers<[1], [0], [0], [1], [0, 0, 1, 1], [], []>} : vector<8x128xf32>, vector<128x128xf32>, vector<8x128xf32> -> vector<8x128xf32>
      %c0_74 = arith.constant 0 : index
      %c0_75 = arith.constant 0 : index
      %167 = vector.load %arg7[%c0_74, %c0_75] : memref<1x128xf32, #tpu.memory_space<vmem>>, vector<1x128xf32>
      %168 = vector.broadcast %167 : vector<1x128xf32> to vector<8x128xf32>
      %169 = arith.addf %166, %168 : vector<8x128xf32>
      %c0_76 = arith.constant 0 : index
      %c0_77 = arith.constant 0 : index
      %170 = vector.load %arg8[%c0_76, %c0_77] : memref<8x128xf32, #tpu.memory_space<vmem>>, vector<8x128xf32>
      tpu.vector_store %arg8[%c0_76, %c0_77], %169 {strides = array<i32>} : memref<8x128xf32, #tpu.memory_space<vmem>>, vector<8x128xf32>,
    } else {
    }
    return
  }
  func.func @transform_0(%arg0: i32, %arg1: i32) -> (i32, i32, i32) {
    %c0_i32 = arith.constant 0 : i32
    %c0_i32_0 = arith.constant 0 : i32
    return %arg1, %arg0, %c0_i32 : i32, i32, i32
  }
  func.func @transform_1(%arg0: i32, %arg1: i32) -> (i32, i32) {
    %c0_i32 = arith.constant 0 : i32
    %c0_i32_0 = arith.constant 0 : i32
    %c0_i32_1 = arith.constant 0 : i32
    return %c0_i32, %c0_i32_0 : i32, i32
  }
  func.func @transform_2(%arg0: i32, %arg1: i32) -> (i32, i32) {
    %c0_i32 = arith.constant 0 : i32
    %c0_i32_0 = arith.constant 0 : i32
    %c0_i32_1 = arith.constant 0 : i32
    return %c0_i32, %c0_i32_0 : i32, i32
  }
  func.func @transform_3(%arg0: i32, %arg1: i32) -> (i32, i32) {
    %c0_i32 = arith.constant 0 : i32
    %c0_i32_0 = arith.constant 0 : i32
    %c0_i32_1 = arith.constant 0 : i32
    return %c0_i32, %c0_i32_0 : i32, i32
  }
  func.func @transform_4(%arg0: i32, %arg1: i32) -> (i32, i32) {
    %c0_i32 = arith.constant 0 : i32
    %c0_i32_0 = arith.constant 0 : i32
    %c0_i32_1 = arith.constant 0 : i32
    return %c0_i32, %c0_i32_0 : i32, i32
  }
  func.func @transform_5(%arg0: i32, %arg1: i32) -> (i32, i32) {
    %c0_i32 = arith.constant 0 : i32
    %c0_i32_0 = arith.constant 0 : i32
    %c0_i32_1 = arith.constant 0 : i32
    return %c0_i32, %c0_i32_0 : i32, i32
  }
  func.func @transform_6(%arg0: i32, %arg1: i32) -> (i32, i32) {
    %c0_i32 = arith.constant 0 : i32
    %c0_i32_0 = arith.constant 0 : i32
    return %arg0, %c0_i32 : i32, i32
  }
}

</mosaic_0001>

<llo_original>
// kernel: tpu_custom_call.1
$region0: #{tpu_custom_call.1}
  #allocation0 [shape = 'u32[]', space=smem, size = 0x4, offset = 0x4, fixed_abs, tag = 'smem constant byte address 0x4 - core index']
  #allocation1 [shape = 'u32[144,128]{1,0:T(1,128)}', space=vmem, size = 0x12000, scoped, tag = 'internal scratch']
  #allocation2 [shape = 'f32[4,8,512]{2,1,0:T(8,128)}', space=vmem, size = 0x10000, scoped, tag = 'scratch operand']
  #allocation3 [shape = 'f32[8,128]{1,0:T(8,128)}', space=vmem, size = 0x1000, scoped, tag = 'scratch operand']
  #allocation4 [shape = 'f32[8,128]{1,0:T(8,128)}', space=vmem, size = 0x1000, scoped, tag = 'scratch operand']
  %s0 = inlined_call_operand.vmem [shape: f32[8,8,4], index: 0, kind: input, shape index: {}]
  %s1 = inlined_call_operand.vmem [shape: f32[4,512], index: 1, kind: input, shape index: {}]
  %s2 = inlined_call_operand.hbm [shape: f32[128,512], index: 2, kind: input, shape index: {}]
  %s3 = inlined_call_operand.vmem [shape: f32[1,512], index: 3, kind: input, shape index: {}]
  %s4 = inlined_call_operand.hbm [shape: f32[128,128], index: 4, kind: input, shape index: {}]
  %s5 = inlined_call_operand.vmem [shape: f32[1,128], index: 5, kind: input, shape index: {}]
  %s6 = inlined_call_operand.hbm [shape: f32[8,128], index: 6, kind: output, shape index: {}]
  %s7 = sld [smem:[#allocation0]]
  $region73: #{tpu_custom_call.1} parent=0
    _
  %s9 = ssub.s32 1, %s7
  %s10 = scalar_select 0, %s9, %s7
  $region1: #{tpu_custom_call.1} parent=0
    #allocation5 [shape = 'u8[262144]{0}', space=vmem, size = 0x40000, scoped, tag = 'input window, operand 2, single buffered']
    #allocation6 [shape = 's32[2]{0}', space=sflag, size = 0x8, scoped, tag = 'scoped memory for tpu_custom_call.1']
    #allocation7 [shape = 's32[2]{0}', space=sflag, size = 0x8, scoped, tag = 'scoped memory for tpu_custom_call.1']
    #allocation8 [shape = 'u8[65536]{0}', space=vmem, size = 0x10000, scoped, tag = 'input window, operand 4, single buffered']
    #allocation9 [shape = 's32[1]{0}', space=sflag, size = 0x4, scoped, tag = 'scoped memory for tpu_custom_call.1']
    #allocation10 [shape = 'u8[4096]{0}', space=vmem, size = 0x1000, scoped, tag = 'output window, operand 0, single buffered']
    %11 = vsyncpa [#allocation6], 0
    %12 = vsyncpa [#allocation9], 0
    %13 = vsyncpa [#allocation7], 0
    loop: start=0, step=1, limit=4
    $region2: #{tpu_custom_call.1} parent=1 // loop_pre_header
      _
    $region3: #{tpu_custom_call.1} parent=1 // loop_header
      %s15 = sphi 0, %s19
      %p16 = scmp.ge.s32.totalorder %s15, 4
      %s22 = sphi 0, %s34
      %s23 = sphi 0, %s30
      %s24 = sphi 0, %s22
      %s25 = sphi 0, %s23
      %s26 = sphi 0, %s24
      %s27 = sphi 0, %s25
      %s39 = sphi 0, %s41
      %s42 = sphi 0, %s39
      %s43 = sphi 0, %s42
      %s59 = sphi 0, %s43
      %s63 = sphi 0, %s63
      %s65 = sphi 0, %s63
      %s66 = sphi 0, %s65
      %s80 = sphi 0, %s66
      %s84 = sphi 0, %s84
      %s86 = sphi 0, %s84
      %s87 = sphi 0, %s86
      %s101 = sphi 0, %s87
      %s105 = sphi 0, %s105
      %s107 = sphi 0, %s105
      %s108 = sphi 0, %s107
      %s122 = sphi 0, %s108
      %s126 = sphi 0, %s126
      %s128 = sphi 0, %s126
      %s129 = sphi 0, %s128
      %s143 = sphi 0, %s129
      %s147 = sphi 0, %s147
      %s149 = sphi 0, %s147
      %s150 = sphi 0, %s149
      %s164 = sphi 0, %s150
      %s170 = sphi 0, %s172
      %s173 = sphi 0, %s170
      %s174 = sphi 0, %s173
      %s190 = sphi 0, %s174
    $region4: #{tpu_custom_call.1} parent=1 // loop_header_branch
      %18 = sbr.rel (%p16) target = $region8
    $region5: #{tpu_custom_call.1} parent=1 // loop_body
      %s20 = ssub.s32 %s15, 1
      %s21 = ssub.s32 %s15, 2
      %s28 = sadd.s32 1, %s23
      %p29 = scmp.ge.s32.totalorder %s28, 2
      %s30 = scalar_select %p29, 0, %s28
      %s31 = sadd.s32 1, %s22
      %s32 = scalar_select %p29, %s31, %s22
      %p33 = scmp.ge.s32.totalorder %s32, 1
      %s34 = scalar_select %p33, 0, %s32
      %s35 = ssub.s32 %s23, %s30
      %s36 = ssub.s32 %s22, %s34
      %s37 = sor.u32 %s35, %s36
      %p38 = scmp.eq.s32.totalorder %s37, 0
      %s40 = sadd.s32 %s39, 1
      %s41 = scalar_select %p38, %s39, %s40
      %p44 = pneg %p38
      %p45 = scmp.eq.s32.totalorder %s15, 1
      %p46 = por %p44, %p45
      %p47 = scmp.ne.s32.totalorder %s39, %s42
      %p48 = scmp.eq.s32.totalorder %s15, 0
      %p49 = por %p47, %p48
      %p50 = scmp.ne.s32.totalorder %s39, %s42
      %p51 = scmp.eq.s32.totalorder %s20, 1
      %p52 = por %p50, %p51
      %p53 = scmp.ne.s32.totalorder %s42, %s43
      %p54 = scmp.eq.s32.totalorder %s20, 0
      %p55 = por %p53, %p54
      %p56 = scmp.ne.s32.totalorder %s42, %s43
      %p57 = scmp.eq.s32.totalorder %s21, 1
      %p58 = por %p56, %p57
      %p60 = scmp.ne.s32.totalorder %s43, %s59
      %p61 = scmp.eq.s32.totalorder %s21, 0
      %p62 = por %p60, %p61
      %s64 = sadd.s32 %s63, 1
      %p67 = scmp.eq.s32.totalorder %s15, 1
      %p68 = scmp.ne.s32.totalorder %s63, %s65
      %p69 = scmp.eq.s32.totalorder %s15, 0
      %p70 = por %p68, %p69
      %p71 = scmp.ne.s32.totalorder %s63, %s65
      %p72 = scmp.eq.s32.totalorder %s20, 1
      %p73 = por %p71, %p72
      %p74 = scmp.ne.s32.totalorder %s65, %s66
      %p75 = scmp.eq.s32.totalorder %s20, 0
      %p76 = por %p74, %p75
      %p77 = scmp.ne.s32.totalorder %s65, %s66
      %p78 = scmp.eq.s32.totalorder %s21, 1
      %p79 = por %p77, %p78
      %p81 = scmp.ne.s32.totalorder %s66, %s80
      %p82 = scmp.eq.s32.totalorder %s21, 0
      %p83 = por %p81, %p82
      %s85 = sadd.s32 %s84, 1
      %p88 = scmp.eq.s32.totalorder %s15, 1
      %p89 = scmp.ne.s32.totalorder %s84, %s86
      %p90 = scmp.eq.s32.totalorder %s15, 0
      %p91 = por %p89, %p90
      %p92 = scmp.ne.s32.totalorder %s84, %s86
      %p93 = scmp.eq.s32.totalorder %s20, 1
      %p94 = por %p92, %p93
      %p95 = scmp.ne.s32.totalorder %s86, %s87
      %p96 = scmp.eq.s32.totalorder %s20, 0
      %p97 = por %p95, %p96
      %p98 = scmp.ne.s32.totalorder %s86, %s87
      %p99 = scmp.eq.s32.totalorder %s21, 1
      %p100 = por %p98, %p99
      %p102 = scmp.ne.s32.totalorder %s87, %s101
      %p103 = scmp.eq.s32.totalorder %s21, 0
      %p104 = por %p102, %p103
      %s106 = sadd.s32 %s105, 1
      %p109 = scmp.eq.s32.totalorder %s15, 1
      %p110 = scmp.ne.s32.totalorder %s105, %s107
      %p111 = scmp.eq.s32.totalorder %s15, 0
      %p112 = por %p110, %p111
      %p113 = scmp.ne.s32.totalorder %s105, %s107
      %p114 = scmp.eq.s32.totalorder %s20, 1
      %p115 = por %p113, %p114
      %p116 = scmp.ne.s32.totalorder %s107, %s108
      %p117 = scmp.eq.s32.totalorder %s20, 0
      %p118 = por %p116, %p117
      %p119 = scmp.ne.s32.totalorder %s107, %s108
      %p120 = scmp.eq.s32.totalorder %s21, 1
      %p121 = por %p119, %p120
      %p123 = scmp.ne.s32.totalorder %s108, %s122
      %p124 = scmp.eq.s32.totalorder %s21, 0
      %p125 = por %p123, %p124
      %s127 = sadd.s32 %s126, 1
      %p130 = scmp.eq.s32.totalorder %s15, 1
      %p131 = scmp.ne.s32.totalorder %s126, %s128
      %p132 = scmp.eq.s32.totalorder %s15, 0
      %p133 = por %p131, %p132
      %p134 = scmp.ne.s32.totalorder %s126, %s128
      %p135 = scmp.eq.s32.totalorder %s20, 1
      %p136 = por %p134, %p135
      %p137 = scmp.ne.s32.totalorder %s128, %s129
      %p138 = scmp.eq.s32.totalorder %s20, 0
      %p139 = por %p137, %p138
      %p140 = scmp.ne.s32.totalorder %s128, %s129
      %p141 = scmp.eq.s32.totalorder %s21, 1
      %p142 = por %p140, %p141
      %p144 = scmp.ne.s32.totalorder %s129, %s143
      %p145 = scmp.eq.s32.totalorder %s21, 0
      %p146 = por %p144, %p145
      %s148 = sadd.s32 %s147, 1
      %p151 = scmp.eq.s32.totalorder %s15, 1
      %p152 = scmp.ne.s32.totalorder %s147, %s149
      %p153 = scmp.eq.s32.totalorder %s15, 0
      %p154 = por %p152, %p153
      %p155 = scmp.ne.s32.totalorder %s147, %s149
      %p156 = scmp.eq.s32.totalorder %s20, 1
      %p157 = por %p155, %p156
      %p158 = scmp.ne.s32.totalorder %s149, %s150
      %p159 = scmp.eq.s32.totalorder %s20, 0
      %p160 = por %p158, %p159
      %p161 = scmp.ne.s32.totalorder %s149, %s150
      %p162 = scmp.eq.s32.totalorder %s21, 1
      %p163 = por %p161, %p162
      %p165 = scmp.ne.s32.totalorder %s150, %s164
      %p166 = scmp.eq.s32.totalorder %s21, 0
      %p167 = por %p165, %p166
      %s168 = ssub.s32 %s22, %s34
      %p169 = scmp.eq.s32.totalorder %s168, 0
      %s171 = sadd.s32 %s170, 1
      %s172 = scalar_select %p169, %s170, %s171
      %p175 = pneg %p169
      %p176 = scmp.eq.s32.totalorder %s15, 1
      %p177 = por %p175, %p176
      %p178 = scmp.ne.s32.totalorder %s170, %s173
      %p179 = scmp.eq.s32.totalorder %s15, 0
      %p180 = por %p178, %p179
      %p181 = scmp.ne.s32.totalorder %s170, %s173
      %p182 = scmp.eq.s32.totalorder %s20, 1
      %p183 = por %p181, %p182
      %p184 = scmp.ne.s32.totalorder %s173, %s174
      %p185 = scmp.eq.s32.totalorder %s20, 0
      %p186 = por %p184, %p185
      %p187 = scmp.ne.s32.totalorder %s173, %s174
      %p188 = scmp.eq.s32.totalorder %s21, 1
      %p189 = por %p187, %p188
      %p191 = scmp.ne.s32.totalorder %s174, %s190
      %p192 = scmp.eq.s32.totalorder %s21, 0
      %p193 = por %p191, %p192
      %p194 = scmp.le.s32.totalorder 1, %s15
      %p195 = scmp.lt.s32.totalorder %s15, 3
      %p196 = pnand %p194, %p195
      %p197 = pneg %p196
      // Predicated region
      $region9: #{tpu_custom_call.1} parent=5 // pred_check
        _
      $region10: #{tpu_custom_call.1} parent=5 // pred_check_branch
        %199 = sbr.rel (%p196) target = $region12
      $region11: #{tpu_custom_call.1} parent=5 // pred_region
        %s200 = ssub.s32 %s15, 1
        // Predicated region
        $region13: #{tpu_custom_call.1} parent=11 // pred_check
          %p201 = pneg %p76
        $region14: #{tpu_custom_call.1} parent=11 // pred_check_branch
          %203 = sbr.rel (%p201) target = $region16
        $region15: #{tpu_custom_call.1} parent=11 // pred_region
          _
        $region16: #{tpu_custom_call.1} parent=11 // pred_fallthru
          _
        // Predicated region
        $region17: #{tpu_custom_call.1} parent=11 // pred_check
          %p204 = pneg %p97
        $region18: #{tpu_custom_call.1} parent=11 // pred_check_branch
          %206 = sbr.rel (%p204) target = $region20
        $region19: #{tpu_custom_call.1} parent=11 // pred_region
          %s208 = ssub.s32 8192, 8192
          %209 = vsyncadd [#allocation6], %s208
          %s210 = sshll.u32 [#allocation5], 4
          %s211 = int_to_ptr.vmem [resolvable:$true] %s210
          %216 = dma.hbm_to_vmem [thread:$0]  %s2, 8192, %s211, [#allocation6], 512, 512, 32
        $region20: #{tpu_custom_call.1} parent=11 // pred_fallthru
          _
        // Predicated region
        $region21: #{tpu_custom_call.1} parent=11 // pred_check
          %p217 = pneg %p118
        $region22: #{tpu_custom_call.1} parent=11 // pred_check_branch
          %219 = sbr.rel (%p217) target = $region24
        $region23: #{tpu_custom_call.1} parent=11 // pred_region
          _
        $region24: #{tpu_custom_call.1} parent=11 // pred_fallthru
          _
        // Predicated region
        $region25: #{tpu_custom_call.1} parent=11 // pred_check
          %p220 = pneg %p139
        $region26: #{tpu_custom_call.1} parent=11 // pred_check_branch
          %222 = sbr.rel (%p220) target = $region28
        $region27: #{tpu_custom_call.1} parent=11 // pred_region
          %s224 = ssub.s32 2048, 2048
          %225 = vsyncadd [#allocation9], %s224
          %s226 = sshll.u32 [#allocation8], 4
          %s227 = int_to_ptr.vmem [resolvable:$true] %s226
          %232 = dma.hbm_to_vmem [thread:$0]  %s4, 2048, %s227, [#allocation9], 128, 128, 8
        $region28: #{tpu_custom_call.1} parent=11 // pred_fallthru
          _
        // Predicated region
        $region29: #{tpu_custom_call.1} parent=11 // pred_check
          %p233 = pneg %p160
        $region30: #{tpu_custom_call.1} parent=11 // pred_check_branch
          %235 = sbr.rel (%p233) target = $region32
        $region31: #{tpu_custom_call.1} parent=11 // pred_region
          _
        $region32: #{tpu_custom_call.1} parent=11 // pred_fallthru
          _
      $region12: #{tpu_custom_call.1} parent=5 // pred_fallthru
        _
      %p236 = scmp.lt.s32.totalorder %s15, 2
      // Predicated region
      $region33: #{tpu_custom_call.1} parent=5 // pred_check
        %p237 = pneg %p236
      $region34: #{tpu_custom_call.1} parent=5 // pred_check_branch
        %239 = sbr.rel (%p237) target = $region36
      $region35: #{tpu_custom_call.1} parent=5 // pred_region
        // Predicated region
        $region37: #{tpu_custom_call.1} parent=35 // pred_check
          %p240 = pneg %p49
        $region38: #{tpu_custom_call.1} parent=35 // pred_check_branch
          %242 = sbr.rel (%p240) target = $region40
        $region39: #{tpu_custom_call.1} parent=35 // pred_region
          %s243 = smul.u32 4, %s23
          %p244 = scmp.lt.s32.totalorder %s243, 7
          %s245 = scalar_select %p244, %s243, 7
          %p246 = scmp.lt.s32.totalorder %s22, 0
          %s247 = scalar_select %p246, %s22, 0
          %s248 = sadd.s32 %s247, %s245
          %s249 = smul.addr %s248, 8
          %s250 = scalar_lea.vmem %s0, %s249
          %s251 = smul.u32 4, %s23
        $region40: #{tpu_custom_call.1} parent=35 // pred_fallthru
          _
      $region36: #{tpu_custom_call.1} parent=5 // pred_fallthru
        _
      %p252 = scmp.le.s32.totalorder 1, %s15
      %p253 = scmp.lt.s32.totalorder %s15, 3
      %p254 = pnand %p252, %p253
      %p255 = pneg %p254
      // Predicated region
      $region41: #{tpu_custom_call.1} parent=5 // pred_check
        _
      $region42: #{tpu_custom_call.1} parent=5 // pred_check_branch
        %257 = sbr.rel (%p254) target = $region44
      $region43: #{tpu_custom_call.1} parent=5 // pred_region
        %s258 = ssub.s32 %s15, 1
        // Predicated region
        $region45: #{tpu_custom_call.1} parent=43 // pred_check
          %p259 = pneg %p97
        $region46: #{tpu_custom_call.1} parent=43 // pred_check_branch
          %261 = sbr.rel (%p259) target = $region48
        $region47: #{tpu_custom_call.1} parent=43 // pred_region
          %262 = dma.done [#allocation6], 8192
        $region48: #{tpu_custom_call.1} parent=43 // pred_fallthru
          _
        // Predicated region
        $region49: #{tpu_custom_call.1} parent=43 // pred_check
          %p263 = pneg %p139
        $region50: #{tpu_custom_call.1} parent=43 // pred_check_branch
          %265 = sbr.rel (%p263) target = $region52
        $region51: #{tpu_custom_call.1} parent=43 // pred_region
          %266 = dma.done [#allocation9], 2048
        $region52: #{tpu_custom_call.1} parent=43 // pred_fallthru
          _
        %s267 = smul.u32 4, %s25
        %p268 = scmp.lt.s32.totalorder %s267, 7
        %s269 = scalar_select %p268, %s267, 7
        %p270 = scmp.lt.s32.totalorder %s24, 0
        %s271 = scalar_select %p270, %s24, 0
        %s272 = sadd.s32 %s271, %s269
        %s273 = smul.addr %s272, 8
        %s274 = scalar_lea.vmem %s0, %s273
        %p275 = pneg %p55
        %p276 = pneg %p52
        %p277 = pneg %p76
        %p278 = pneg %p73
        %p279 = pneg %p97
        %p280 = pneg %p94
        %p281 = pneg %p118
        %p282 = pneg %p115
        %p283 = pneg %p139
        %p284 = pneg %p136
        %p285 = pneg %p160
        %p286 = pneg %p157
        %p287 = pneg %p186
        %p288 = pneg %p183
        %s289 = smul.u32 4, %s25
        %p290 = scmp.lt.s32.totalorder %s289, 7
        %s291 = scalar_select %p290, %s289, 7
        %p292 = scmp.lt.s32.totalorder %s24, 0
        %s293 = scalar_select %p292, %s24, 0
        %s294 = sadd.s32 %s293, %s291
        %s295 = smul.addr %s294, 8
        %s296 = scalar_lea.vmem %s0, %s295
        %s297 = smul.u32 4, %s25
        %p298 = scmp.eq.s32.totalorder %s25, 0
        // Predicated region
        $region53: #{tpu_custom_call.1} parent=43 // pred_check
          %p299 = pneg %p298
        $region54: #{tpu_custom_call.1} parent=43 // pred_check_branch
          %301 = sbr.rel (%p299) target = $region56
        $region55: #{tpu_custom_call.1} parent=43 // pred_region
          %302 = vst [vmem:[#allocation3] sm:$0xff] 0.0
          %303 = vst [vmem:[#allocation4] sm:$0xff] 0.0
        $region56: #{tpu_custom_call.1} parent=43 // pred_fallthru
          _
        %v304 = vld [vmem:[%s296] sm:$0xff]
        %v305 = vld [vmem:[%s296 + $0x8] sm:$0xff]
        %v306 = vld [vmem:[%s296 + $0x10] sm:$0xff]
        %v307 = vld [vmem:[%s296 + $0x18] sm:$0xff]
        %v308 = vld [vmem:[%s1] sm:$0xff]
        %v309 = vld [vmem:[%s1 + $0x8] sm:$0xff]
        %v312 = vcombine.high %v308, %v308
        %v313 = vcombine.high %v309, %v309
        %vm314 = vcmask 31744
        %v316 = vsel %vm314, %v304, 0
        %v319 = vsel %vm314, %v305, 0
        %v322 = vsel %vm314, %v306, 0
        %v325 = vsel %vm314, %v307, 0
        %vm327 = vcmask 1043456
        %v328 = vsel %vm327, %v308, 0
        %v330 = vsel %vm327, %v312, 0
        %v332 = vsel %vm327, %v309, 0
        %v334 = vsel %vm327, %v313, 0
        %336 = vmatprep.subr.mxu0 %v330
        %337 = vmatpush1.msra.mxu0 %v328
        %338 = vmatprep.subr.mxu0 0.0
        %339 = vmatpush1.msra.mxu0 0.0
        %340 = vmatprep.subr.mxu0 0.0
        %341 = vmatpush1.msra.mxu0 0.0
        %342 = vmatprep.subr.mxu0 0.0
        %343 = vmatpush1.msra.mxu0 0.0
        %344 = vmatprep.subr.mxu0 0.0
        %345 = vmatpush1.msra.mxu0 0.0
        %346 = vmatprep.subr.mxu0 0.0
        %347 = vmatpush1.msra.mxu0 0.0
        %348 = vmatprep.subr.mxu0 0.0
        %349 = vmatpush1.msra.mxu0 0.0
        %350 = vmatprep.subr.mxu0 0.0
        %351 = vmatpush1.msra.mxu0 0.0
        %352 = vmatprep.subr.mxu0 0.0
        %353 = vmatpush1.msra.mxu0 0.0
        %354 = vmatprep.subr.mxu0 0.0
        %355 = vmatpush1.msra.mxu0 0.0
        %356 = vmatprep.subr.mxu0 0.0
        %357 = vmatpush1.msra.mxu0 0.0
        %358 = vmatprep.subr.mxu0 0.0
        %359 = vmatpush1.msra.mxu0 0.0
        %360 = vmatprep.subr.mxu0 0.0
        %361 = vmatpush1.msra.mxu0 0.0
        %362 = vmatprep.subr.mxu0 0.0
        %363 = vmatpush1.msra.mxu0 0.0
        %364 = vmatprep.subr.mxu0 0.0
        %365 = vmatpush1.msra.mxu0 0.0
        %366 = vmatprep.subr.mxu0 0.0
        %367 = vmatpush1.msra.mxu0 0.0
        %368 = vmatprep.subr.mxu0 0.0
        %369 = vmatpush1.msra.mxu0 0.0
        %370 = vmatprep.subr.mxu0 0.0
        %371 = vmatpush1.msra.mxu0 0.0
        %372 = vmatprep.subr.mxu0 0.0
        %373 = vmatpush1.msra.mxu0 0.0
        %374 = vmatprep.subr.mxu0 0.0
        %375 = vmatpush1.msra.mxu0 0.0
        %376 = vmatprep.subr.mxu0 0.0
        %377 = vmatpush1.msra.mxu0 0.0
        %378 = vmatprep.subr.mxu0 0.0
        %379 = vmatpush1.msra.mxu0 0.0
        %380 = vmatprep.subr.mxu0 0.0
        %381 = vmatpush1.msra.mxu0 0.0
        %382 = vmatprep.subr.mxu0 0.0
        %383 = vmatpush1.msra.mxu0 0.0
        %384 = vmatprep.subr.mxu0 0.0
        %385 = vmatpush1.msra.mxu0 0.0
        %386 = vmatprep.subr.mxu0 0.0
        %387 = vmatpush1.msra.mxu0 0.0
        %388 = vmatprep.subr.mxu0 0.0
        %389 = vmatpush1.msra.mxu0 0.0
        %390 = vmatprep.subr.mxu0 0.0
        %391 = vmatpush1.msra.mxu0 0.0
        %392 = vmatprep.subr.mxu0 0.0
        %393 = vmatpush1.msra.mxu0 0.0
        %394 = vmatprep.subr.mxu0 0.0
        %395 = vmatpush1.msra.mxu0 0.0
        %396 = vmatprep.subr.mxu0 0.0
        %397 = vmatpush1.msra.mxu0 0.0
        %398 = vmatprep.subr.mxu0 0.0
        %399 = vmatpush1.msra.mxu0 0.0
        %400 = vmatprep.mubr.f32.mxu0 0.0
        %401 = vmatmul.mubr.f32.gmra.mrb[0].mxu0 %v316
        %v402 = vpop.f32.mrb[0].mxu0
        %v403 = vadd.f32 0.0, %v402
        %v404 = vpop.f32.mrb[0].mxu0
        %v405 = vadd.f32 0.0, %v404
        %406 = vmatprep.mubr.f32.mxu0 0.0
        %407 = vmatmul.mubr.f32.gmra.mrb[0].mxu0 %v319
        %v408 = vpop.f32.mrb[0].mxu0
        %v409 = vadd.f32 0.0, %v408
        %v410 = vpop.f32.mrb[0].mxu0
        %v411 = vadd.f32 0.0, %v410
        %412 = vmatprep.mubr.f32.mxu0 0.0
        %413 = vmatmul.mubr.f32.gmra.mrb[0].mxu0 %v322
        %v414 = vpop.f32.mrb[0].mxu0
        %v415 = vadd.f32 0.0, %v414
        %v416 = vpop.f32.mrb[0].mxu0
        %v417 = vadd.f32 0.0, %v416
        %418 = vmatprep.mubr.f32.mxu0 0.0
        %419 = vmatmul.mubr.f32.gmra.mrb[0].mxu0 %v325
        %v420 = vpop.f32.mrb[0].mxu0
        %v421 = vadd.f32 0.0, %v420
        %v422 = vpop.f32.mrb[0].mxu0
        %v423 = vadd.f32 0.0, %v422
        %424 = vdwg.mxu0
        %425 = vmatprep.subr.mxu0 %v334
        %426 = vmatpush1.msra.mxu0 %v332
        %427 = vmatprep.subr.mxu0 0.0
        %428 = vmatpush1.msra.mxu0 0.0
        %429 = vmatprep.subr.mxu0 0.0
        %430 = vmatpush1.msra.mxu0 0.0
        %431 = vmatprep.subr.mxu0 0.0
        %432 = vmatpush1.msra.mxu0 0.0
        %433 = vmatprep.subr.mxu0 0.0
        %434 = vmatpush1.msra.mxu0 0.0
        %435 = vmatprep.subr.mxu0 0.0
        %436 = vmatpush1.msra.mxu0 0.0
        %437 = vmatprep.subr.mxu0 0.0
        %438 = vmatpush1.msra.mxu0 0.0
        %439 = vmatprep.subr.mxu0 0.0
        %440 = vmatpush1.msra.mxu0 0.0
        %441 = vmatprep.subr.mxu0 0.0
        %442 = vmatpush1.msra.mxu0 0.0
        %443 = vmatprep.subr.mxu0 0.0
        %444 = vmatpush1.msra.mxu0 0.0
        %445 = vmatprep.subr.mxu0 0.0
        %446 = vmatpush1.msra.mxu0 0.0
        %447 = vmatprep.subr.mxu0 0.0
        %448 = vmatpush1.msra.mxu0 0.0
        %449 = vmatprep.subr.mxu0 0.0
        %450 = vmatpush1.msra.mxu0 0.0
        %451 = vmatprep.subr.mxu0 0.0
        %452 = vmatpush1.msra.mxu0 0.0
        %453 = vmatprep.subr.mxu0 0.0
        %454 = vmatpush1.msra.mxu0 0.0
        %455 = vmatprep.subr.mxu0 0.0
        %456 = vmatpush1.msra.mxu0 0.0
        %457 = vmatprep.subr.mxu0 0.0
        %458 = vmatpush1.msra.mxu0 0.0
        %459 = vmatprep.subr.mxu0 0.0
        %460 = vmatpush1.msra.mxu0 0.0
        %461 = vmatprep.subr.mxu0 0.0
        %462 = vmatpush1.msra.mxu0 0.0
        %463 = vmatprep.subr.mxu0 0.0
        %464 = vmatpush1.msra.mxu0 0.0
        %465 = vmatprep.subr.mxu0 0.0
        %466 = vmatpush1.msra.mxu0 0.0
        %467 = vmatprep.subr.mxu0 0.0
        %468 = vmatpush1.msra.mxu0 0.0
        %469 = vmatprep.subr.mxu0 0.0
        %470 = vmatpush1.msra.mxu0 0.0
        %471 = vmatprep.subr.mxu0 0.0
        %472 = vmatpush1.msra.mxu0 0.0
        %473 = vmatprep.subr.mxu0 0.0
        %474 = vmatpush1.msra.mxu0 0.0
        %475 = vmatprep.subr.mxu0 0.0
        %476 = vmatpush1.msra.mxu0 0.0
        %477 = vmatprep.subr.mxu0 0.0
        %478 = vmatpush1.msra.mxu0 0.0
        %479 = vmatprep.subr.mxu0 0.0
        %480 = vmatpush1.msra.mxu0 0.0
        %481 = vmatprep.subr.mxu0 0.0
        %482 = vmatpush1.msra.mxu0 0.0
        %483 = vmatprep.subr.mxu0 0.0
        %484 = vmatpush1.msra.mxu0 0.0
        %485 = vmatprep.subr.mxu0 0.0
        %486 = vmatpush1.msra.mxu0 0.0
        %487 = vmatprep.subr.mxu0 0.0
        %488 = vmatpush1.msra.mxu0 0.0
        %489 = vmatprep.mubr.f32.mxu0 0.0
        %490 = vmatmul.mubr.f32.gmra.mrb[0].mxu0 %v316
        %v491 = vpop.f32.mrb[0].mxu0
        %v492 = vadd.f32 0.0, %v491
        %v493 = vpop.f32.mrb[0].mxu0
        %v494 = vadd.f32 0.0, %v493
        %495 = vmatprep.mubr.f32.mxu0 0.0
        %496 = vmatmul.mubr.f32.gmra.mrb[0].mxu0 %v319
        %v497 = vpop.f32.mrb[0].mxu0
        %v498 = vadd.f32 0.0, %v497
        %v499 = vpop.f32.mrb[0].mxu0
        %v500 = vadd.f32 0.0, %v499
        %501 = vmatprep.mubr.f32.mxu0 0.0
        %502 = vmatmul.mubr.f32.gmra.mrb[0].mxu0 %v322
        %v503 = vpop.f32.mrb[0].mxu0
        %v504 = vadd.f32 0.0, %v503
        %v505 = vpop.f32.mrb[0].mxu0
        %v506 = vadd.f32 0.0, %v505
        %507 = vmatprep.mubr.f32.mxu0 0.0
        %508 = vmatmul.mubr.f32.gmra.mrb[0].mxu0 %v325
        %v509 = vpop.f32.mrb[0].mxu0
        %v510 = vadd.f32 0.0, %v509
        %v511 = vpop.f32.mrb[0].mxu0
        %v512 = vadd.f32 0.0, %v511
        %513 = vdwg.mxu0
        %v514 = vld [vmem:[%s3] sm:$0xf]
        %v516 = vlaneseq
        %v517 = vshrl.u32 %v516, 7
        %v518 = vsub.s32 0, %v517
        %v519 = vrot.slane %v514, %v518
        %v520 = vlaneseq
        %v521 = vshrl.u32 %v520, 7
        %v522 = vsub.s32 1, %v521
        %v523 = vrot.slane %v514, %v522
        %v524 = vlaneseq
        %v525 = vshrl.u32 %v524, 7
        %v526 = vsub.s32 2, %v525
        %v527 = vrot.slane %v514, %v526
        %v528 = vlaneseq
        %v529 = vshrl.u32 %v528, 7
        %v530 = vsub.s32 3, %v529
        %v531 = vrot.slane %v514, %v530
        %v536 = vadd.f32 %v403, %v519
        %v537 = vadd.f32 %v405, %v523
        %v538 = vadd.f32 %v492, %v527
        %v539 = vadd.f32 %v494, %v531
        %v540 = vadd.f32 %v409, %v519
        %v541 = vadd.f32 %v411, %v523
        %v542 = vadd.f32 %v498, %v527
        %v543 = vadd.f32 %v500, %v531
        %v544 = vadd.f32 %v415, %v519
        %v545 = vadd.f32 %v417, %v523
        %v546 = vadd.f32 %v504, %v527
        %v547 = vadd.f32 %v506, %v531
        %v548 = vadd.f32 %v421, %v519
        %v549 = vadd.f32 %v423, %v523
        %v550 = vadd.f32 %v510, %v527
        %v551 = vadd.f32 %v512, %v531
        %552 = vst [vmem:[#allocation2] sm:$0xff] %v536
        %553 = vst [vmem:[#allocation2 + $0x8] sm:$0xff] %v537
        %554 = vst [vmem:[#allocation2 + $0x10] sm:$0xff] %v538
        %555 = vst [vmem:[#allocation2 + $0x18] sm:$0xff] %v539
        %556 = vst [vmem:[#allocation2 + $0x20] sm:$0xff] %v540
        %557 = vst [vmem:[#allocation2 + $0x28] sm:$0xff] %v541
        %558 = vst [vmem:[#allocation2 + $0x30] sm:$0xff] %v542
        %559 = vst [vmem:[#allocation2 + $0x38] sm:$0xff] %v543
        %560 = vst [vmem:[#allocation2 + $0x40] sm:$0xff] %v544
        %561 = vst [vmem:[#allocation2 + $0x48] sm:$0xff] %v545
        %562 = vst [vmem:[#allocation2 + $0x50] sm:$0xff] %v546
        %563 = vst [vmem:[#allocation2 + $0x58] sm:$0xff] %v547
        %564 = vst [vmem:[#allocation2 + $0x60] sm:$0xff] %v548
        %565 = vst [vmem:[#allocation2 + $0x68] sm:$0xff] %v549
        %566 = vst [vmem:[#allocation2 + $0x70] sm:$0xff] %v550
        %567 = vst [vmem:[#allocation2 + $0x78] sm:$0xff] %v551
        %v568 = vld [vmem:[#allocation5] sm:$0xff]
        %v569 = vld [vmem:[#allocation5 + $0x8] sm:$0xff]
        %v570 = vld [vmem:[#allocation5 + $0x10] sm:$0xff]
        %v571 = vld [vmem:[#allocation5 + $0x18] sm:$0xff]
        %v572 = vld [vmem:[#allocation5 + $0x20] sm:$0xff]
        %v573 = vld [vmem:[#allocation5 + $0x28] sm:$0xff]
        %v574 = vld [vmem:[#allocation5 + $0x30] sm:$0xff]
        %v575 = vld [vmem:[#allocation5 + $0x38] sm:$0xff]
        %v576 = vld [vmem:[#allocation5 + $0x40] sm:$0xff]
        %v577 = vld [vmem:[#allocation5 + $0x48] sm:$0xff]
        %v578 = vld [vmem:[#allocation5 + $0x50] sm:$0xff]
        %v579 = vld [vmem:[#allocation5 + $0x58] sm:$0xff]
        %v580 = vld [vmem:[#allocation5 + $0x60] sm:$0xff]
        %v581 = vld [vmem:[#allocation5 + $0x68] sm:$0xff]
        %v582 = vld [vmem:[#allocation5 + $0x70] sm:$0xff]
        %v583 = vld [vmem:[#allocation5 + $0x78] sm:$0xff]
        %v584 = vld [vmem:[#allocation5 + $0x80] sm:$0xff]
        %v585 = vld [vmem:[#allocation5 + $0x88] sm:$0xff]
        %v586 = vld [vmem:[#allocation5 + $0x90] sm:$0xff]
        %v587 = vld [vmem:[#allocation5 + $0x98] sm:$0xff]
        %v588 = vld [vmem:[#allocation5 + $0xa0] sm:$0xff]
        %v589 = vld [vmem:[#allocation5 + $0xa8] sm:$0xff]
        %v590 = vld [vmem:[#allocation5 + $0xb0] sm:$0xff]
        %v591 = vld [vmem:[#allocation5 + $0xb8] sm:$0xff]
        %v592 = vld [vmem:[#allocation5 + $0xc0] sm:$0xff]
        %v593 = vld [vmem:[#allocation5 + $0xc8] sm:$0xff]
        %v594 = vld [vmem:[#allocation5 + $0xd0] sm:$0xff]
        %v595 = vld [vmem:[#allocation5 + $0xd8] sm:$0xff]
        %v596 = vld [vmem:[#allocation5 + $0xe0] sm:$0xff]
        %v597 = vld [vmem:[#allocation5 + $0xe8] sm:$0xff]
        %v598 = vld [vmem:[#allocation5 + $0xf0] sm:$0xff]
        %v599 = vld [vmem:[#allocation5 + $0xf8] sm:$0xff]
        %v600 = vld [vmem:[#allocation5 + $0x100] sm:$0xff]
        %v601 = vld [vmem:[#allocation5 + $0x108] sm:$0xff]
        %v602 = vld [vmem:[#allocation5 + $0x110] sm:$0xff]
        %v603 = vld [vmem:[#allocation5 + $0x118] sm:$0xff]
        %v604 = vld [vmem:[#allocation5 + $0x120] sm:$0xff]
        %v605 = vld [vmem:[#allocation5 + $0x128] sm:$0xff]
        %v606 = vld [vmem:[#allocation5 + $0x130] sm:$0xff]
        %v607 = vld [vmem:[#allocation5 + $0x138] sm:$0xff]
        %v608 = vld [vmem:[#allocation5 + $0x140] sm:$0xff]
        %v609 = vld [vmem:[#allocation5 + $0x148] sm:$0xff]
        %v610 = vld [vmem:[#allocation5 + $0x150] sm:$0xff]
        %v611 = vld [vmem:[#allocation5 + $0x158] sm:$0xff]
        %v612 = vld [vmem:[#allocation5 + $0x160] sm:$0xff]
        %v613 = vld [vmem:[#allocation5 + $0x168] sm:$0xff]
        %v614 = vld [vmem:[#allocation5 + $0x170] sm:$0xff]
        %v615 = vld [vmem:[#allocation5 + $0x178] sm:$0xff]
        %v616 = vld [vmem:[#allocation5 + $0x180] sm:$0xff]
        %v617 = vld [vmem:[#allocation5 + $0x188] sm:$0xff]
        %v618 = vld [vmem:[#allocation5 + $0x190] sm:$0xff]
        %v619 = vld [vmem:[#allocation5 + $0x198] sm:$0xff]
        %v620 = vld [vmem:[#allocation5 + $0x1a0] sm:$0xff]
        %v621 = vld [vmem:[#allocation5 + $0x1a8] sm:$0xff]
        %v622 = vld [vmem:[#allocation5 + $0x1b0] sm:$0xff]
        %v623 = vld [vmem:[#allocation5 + $0x1b8] sm:$0xff]
        %v624 = vld [vmem:[#allocation5 + $0x1c0] sm:$0xff]
        %v625 = vld [vmem:[#allocation5 + $0x1c8] sm:$0xff]
        %v626 = vld [vmem:[#allocation5 + $0x1d0] sm:$0xff]
        %v627 = vld [vmem:[#allocation5 + $0x1d8] sm:$0xff]
        %v628 = vld [vmem:[#allocation5 + $0x1e0] sm:$0xff]
        %v629 = vld [vmem:[#allocation5 + $0x1e8] sm:$0xff]
        %v630 = vld [vmem:[#allocation5 + $0x1f0] sm:$0xff]
        %v631 = vld [vmem:[#allocation5 + $0x1f8] sm:$0xff]
        %v632 = vld [vmem:[#allocation3] sm:$0xff]
        %v633 = vld [vmem:[#allocation4] sm:$0xff]
        %v634 = vld [vmem:[#allocation2] sm:$0xff]
        %v635 = vld [vmem:[#allocation2 + $0x8] sm:$0xff]
        %v636 = vld [vmem:[#allocation2 + $0x10] sm:$0xff]
        %v637 = vld [vmem:[#allocation2 + $0x18] sm:$0xff]
        %638 = vmatprep.subr.mxu0 %v569
        %639 = vmatpush1.msra.mxu0 %v568
        %640 = vmatprep.subr.mxu0 %v573
        %641 = vmatpush1.msra.mxu0 %v572
        %642 = vmatprep.subr.mxu0 %v577
        %643 = vmatpush1.msra.mxu0 %v576
        %644 = vmatprep.subr.mxu0 %v581
        %645 = vmatpush1.msra.mxu0 %v580
        %646 = vmatprep.subr.mxu0 %v585
        %647 = vmatpush1.msra.mxu0 %v584
        %648 = vmatprep.subr.mxu0 %v589
        %649 = vmatpush1.msra.mxu0 %v588
        %650 = vmatprep.subr.mxu0 %v593
        %651 = vmatpush1.msra.mxu0 %v592
        %652 = vmatprep.subr.mxu0 %v597
        %653 = vmatpush1.msra.mxu0 %v596
        %654 = vmatprep.subr.mxu0 %v601
        %655 = vmatpush1.msra.mxu0 %v600
        %656 = vmatprep.subr.mxu0 %v605
        %657 = vmatpush1.msra.mxu0 %v604
        %658 = vmatprep.subr.mxu0 %v609
        %659 = vmatpush1.msra.mxu0 %v608
        %660 = vmatprep.subr.mxu0 %v613
        %661 = vmatpush1.msra.mxu0 %v612
        %662 = vmatprep.subr.mxu0 %v617
        %663 = vmatpush1.msra.mxu0 %v616
        %664 = vmatprep.subr.mxu0 %v621
        %665 = vmatpush1.msra.mxu0 %v620
        %666 = vmatprep.subr.mxu0 %v625
        %667 = vmatpush1.msra.mxu0 %v624
        %668 = vmatprep.subr.mxu0 %v629
        %669 = vmatpush1.msra.mxu0 %v628
        %670 = vmatprep.subr.mxu0 0.0
        %671 = vmatpush1.msra.mxu0 0.0
        %672 = vmatprep.subr.mxu0 0.0
        %673 = vmatpush1.msra.mxu0 0.0
        %674 = vmatprep.subr.mxu0 0.0
        %675 = vmatpush1.msra.mxu0 0.0
        %676 = vmatprep.subr.mxu0 0.0
        %677 = vmatpush1.msra.mxu0 0.0
        %678 = vmatprep.subr.mxu0 0.0
        %679 = vmatpush1.msra.mxu0 0.0
        %680 = vmatprep.subr.mxu0 0.0
        %681 = vmatpush1.msra.mxu0 0.0
        %682 = vmatprep.subr.mxu0 0.0
        %683 = vmatpush1.msra.mxu0 0.0
        %684 = vmatprep.subr.mxu0 0.0
        %685 = vmatpush1.msra.mxu0 0.0
        %686 = vmatprep.subr.mxu0 0.0
        %687 = vmatpush1.msra.mxu0 0.0
        %688 = vmatprep.subr.mxu0 0.0
        %689 = vmatpush1.msra.mxu0 0.0
        %690 = vmatprep.subr.mxu0 0.0
        %691 = vmatpush1.msra.mxu0 0.0
        %692 = vmatprep.subr.mxu0 0.0
        %693 = vmatpush1.msra.mxu0 0.0
        %694 = vmatprep.subr.mxu0 0.0
        %695 = vmatpush1.msra.mxu0 0.0
        %696 = vmatprep.subr.mxu0 0.0
        %697 = vmatpush1.msra.mxu0 0.0
        %698 = vmatprep.subr.mxu0 0.0
        %699 = vmatpush1.msra.mxu0 0.0
        %700 = vmatprep.subr.mxu0 0.0
        %701 = vmatpush1.msra.mxu0 0.0
        %702 = vmatprep.mubr.f32.mxu0 0.0
        %703 = vmatmul.mubr.f32.gmra.mrb[0].mxu0 %v632
        %v704 = vpop.f32.mrb[0].mxu0
        %v705 = vadd.f32 0.0, %v704
        %v706 = vpop.f32.mrb[0].mxu0
        %v707 = vadd.f32 0.0, %v706
        %708 = vdwg.mxu0
        %709 = vmatprep.subr.mxu0 %v571
        %710 = vmatpush1.msra.mxu0 %v570
        %711 = vmatprep.subr.mxu0 %v575
        %712 = vmatpush1.msra.mxu0 %v574
        %713 = vmatprep.subr.mxu0 %v579
        %714 = vmatpush1.msra.mxu0 %v578
        %715 = vmatprep.subr.mxu0 %v583
        %716 = vmatpush1.msra.mxu0 %v582
        %717 = vmatprep.subr.mxu0 %v587
        %718 = vmatpush1.msra.mxu0 %v586
        %719 = vmatprep.subr.mxu0 %v591
        %720 = vmatpush1.msra.mxu0 %v590
        %721 = vmatprep.subr.mxu0 %v595
        %722 = vmatpush1.msra.mxu0 %v594
        %723 = vmatprep.subr.mxu0 %v599
        %724 = vmatpush1.msra.mxu0 %v598
        %725 = vmatprep.subr.mxu0 %v603
        %726 = vmatpush1.msra.mxu0 %v602
        %727 = vmatprep.subr.mxu0 %v607
        %728 = vmatpush1.msra.mxu0 %v606
        %729 = vmatprep.subr.mxu0 %v611
        %730 = vmatpush1.msra.mxu0 %v610
        %731 = vmatprep.subr.mxu0 %v615
        %732 = vmatpush1.msra.mxu0 %v614
        %733 = vmatprep.subr.mxu0 %v619
        %734 = vmatpush1.msra.mxu0 %v618
        %735 = vmatprep.subr.mxu0 %v623
        %736 = vmatpush1.msra.mxu0 %v622
        %737 = vmatprep.subr.mxu0 %v627
        %738 = vmatpush1.msra.mxu0 %v626
        %739 = vmatprep.subr.mxu0 %v631
        %740 = vmatpush1.msra.mxu0 %v630
        %741 = vmatprep.subr.mxu0 0.0
        %742 = vmatpush1.msra.mxu0 0.0
        %743 = vmatprep.subr.mxu0 0.0
        %744 = vmatpush1.msra.mxu0 0.0
        %745 = vmatprep.subr.mxu0 0.0
        %746 = vmatpush1.msra.mxu0 0.0
        %747 = vmatprep.subr.mxu0 0.0
        %748 = vmatpush1.msra.mxu0 0.0
        %749 = vmatprep.subr.mxu0 0.0
        %750 = vmatpush1.msra.mxu0 0.0
        %751 = vmatprep.subr.mxu0 0.0
        %752 = vmatpush1.msra.mxu0 0.0
        %753 = vmatprep.subr.mxu0 0.0
        %754 = vmatpush1.msra.mxu0 0.0
        %755 = vmatprep.subr.mxu0 0.0
        %756 = vmatpush1.msra.mxu0 0.0
        %757 = vmatprep.subr.mxu0 0.0
        %758 = vmatpush1.msra.mxu0 0.0
        %759 = vmatprep.subr.mxu0 0.0
        %760 = vmatpush1.msra.mxu0 0.0
        %761 = vmatprep.subr.mxu0 0.0
        %762 = vmatpush1.msra.mxu0 0.0
        %763 = vmatprep.subr.mxu0 0.0
        %764 = vmatpush1.msra.mxu0 0.0
        %765 = vmatprep.subr.mxu0 0.0
        %766 = vmatpush1.msra.mxu0 0.0
        %767 = vmatprep.subr.mxu0 0.0
        %768 = vmatpush1.msra.mxu0 0.0
        %769 = vmatprep.subr.mxu0 0.0
        %770 = vmatpush1.msra.mxu0 0.0
        %771 = vmatprep.subr.mxu0 0.0
        %772 = vmatpush1.msra.mxu0 0.0
        %773 = vmatprep.mubr.f32.mxu0 0.0
        %774 = vmatmul.mubr.f32.gmra.mrb[0].mxu0 %v632
        %v775 = vpop.f32.mrb[0].mxu0
        %v776 = vadd.f32 0.0, %v775
        %v777 = vpop.f32.mrb[0].mxu0
        %v778 = vadd.f32 0.0, %v777
        %779 = vdwg.mxu0
        %v780 = vadd.f32 %v634, %v705
        %v781 = vadd.f32 %v635, %v707
        %v782 = vadd.f32 %v636, %v776
        %v783 = vadd.f32 %v637, %v778
        %v784 = vmul.f32 %v780, 0.5
        %v785 = vtanh.pop %v784
        %v786 = vmul.f32 %v785, 0.5
        %v787 = vadd.f32 %v786, 0.5
        %v788 = vmul.f32 %v781, 0.5
        %v789 = vtanh.pop %v788
        %v790 = vmul.f32 %v789, 0.5
        %v791 = vadd.f32 %v790, 0.5
        %v792 = vtanh.pop %v782
        %v793 = vmul.f32 %v783, 0.5
        %v794 = vtanh.pop %v793
        %v795 = vmul.f32 %v794, 0.5
        %v796 = vadd.f32 %v795, 0.5
        %v797 = vmul.f32 %v791, %v633
        %v798 = vmul.f32 %v787, %v792
        %v799 = vadd.f32 %v797, %v798
        %v800 = vtanh.pop %v799
        %v801 = vmul.f32 %v796, %v800
        %s802 = scalar_lea.vmem [#allocation2], 32
        %v803 = vld [vmem:[%s802] sm:$0xff]
        %v804 = vld [vmem:[%s802 + $0x8] sm:$0xff]
        %v805 = vld [vmem:[%s802 + $0x10] sm:$0xff]
        %v806 = vld [vmem:[%s802 + $0x18] sm:$0xff]
        %807 = vmatprep.subr.mxu0 %v569
        %808 = vmatpush1.msra.mxu0 %v568
        %809 = vmatprep.subr.mxu0 %v573
        %810 = vmatpush1.msra.mxu0 %v572
        %811 = vmatprep.subr.mxu0 %v577
        %812 = vmatpush1.msra.mxu0 %v576
        %813 = vmatprep.subr.mxu0 %v581
        %814 = vmatpush1.msra.mxu0 %v580
        %815 = vmatprep.subr.mxu0 %v585
        %816 = vmatpush1.msra.mxu0 %v584
        %817 = vmatprep.subr.mxu0 %v589
        %818 = vmatpush1.msra.mxu0 %v588
        %819 = vmatprep.subr.mxu0 %v593
        %820 = vmatpush1.msra.mxu0 %v592
        %821 = vmatprep.subr.mxu0 %v597
        %822 = vmatpush1.msra.mxu0 %v596
        %823 = vmatprep.subr.mxu0 %v601
        %824 = vmatpush1.msra.mxu0 %v600
        %825 = vmatprep.subr.mxu0 %v605
        %826 = vmatpush1.msra.mxu0 %v604
        %827 = vmatprep.subr.mxu0 %v609
        %828 = vmatpush1.msra.mxu0 %v608
        %829 = vmatprep.subr.mxu0 %v613
        %830 = vmatpush1.msra.mxu0 %v612
        %831 = vmatprep.subr.mxu0 %v617
        %832 = vmatpush1.msra.mxu0 %v616
        %833 = vmatprep.subr.mxu0 %v621
        %834 = vmatpush1.msra.mxu0 %v620
        %835 = vmatprep.subr.mxu0 %v625
        %836 = vmatpush1.msra.mxu0 %v624
        %837 = vmatprep.subr.mxu0 %v629
        %838 = vmatpush1.msra.mxu0 %v628
        %839 = vmatprep.subr.mxu0 0.0
        %840 = vmatpush1.msra.mxu0 0.0
        %841 = vmatprep.subr.mxu0 0.0
        %842 = vmatpush1.msra.mxu0 0.0
        %843 = vmatprep.subr.mxu0 0.0
        %844 = vmatpush1.msra.mxu0 0.0
        %845 = vmatprep.subr.mxu0 0.0
        %846 = vmatpush1.msra.mxu0 0.0
        %847 = vmatprep.subr.mxu0 0.0
        %848 = vmatpush1.msra.mxu0 0.0
        %849 = vmatprep.subr.mxu0 0.0
        %850 = vmatpush1.msra.mxu0 0.0
        %851 = vmatprep.subr.mxu0 0.0
        %852 = vmatpush1.msra.mxu0 0.0
        %853 = vmatprep.subr.mxu0 0.0
        %854 = vmatpush1.msra.mxu0 0.0
        %855 = vmatprep.subr.mxu0 0.0
        %856 = vmatpush1.msra.mxu0 0.0
        %857 = vmatprep.subr.mxu0 0.0
        %858 = vmatpush1.msra.mxu0 0.0
        %859 = vmatprep.subr.mxu0 0.0
        %860 = vmatpush1.msra.mxu0 0.0
        %861 = vmatprep.subr.mxu0 0.0
        %862 = vmatpush1.msra.mxu0 0.0
        %863 = vmatprep.subr.mxu0 0.0
        %864 = vmatpush1.msra.mxu0 0.0
        %865 = vmatprep.subr.mxu0 0.0
        %866 = vmatpush1.msra.mxu0 0.0
        %867 = vmatprep.subr.mxu0 0.0
        %868 = vmatpush1.msra.mxu0 0.0
        %869 = vmatprep.subr.mxu0 0.0
        %870 = vmatpush1.msra.mxu0 0.0
        %871 = vmatprep.mubr.f32.mxu0 0.0
        %872 = vmatmul.mubr.f32.gmra.mrb[0].mxu0 %v801
        %v873 = vpop.f32.mrb[0].mxu0
        %v874 = vadd.f32 0.0, %v873
        %v875 = vpop.f32.mrb[0].mxu0
        %v876 = vadd.f32 0.0, %v875
        %877 = vdwg.mxu0
        %878 = vmatprep.subr.mxu0 %v571
        %879 = vmatpush1.msra.mxu0 %v570
        %880 = vmatprep.subr.mxu0 %v575
        %881 = vmatpush1.msra.mxu0 %v574
        %882 = vmatprep.subr.mxu0 %v579
        %883 = vmatpush1.msra.mxu0 %v578
        %884 = vmatprep.subr.mxu0 %v583
        %885 = vmatpush1.msra.mxu0 %v582
        %886 = vmatprep.subr.mxu0 %v587
        %887 = vmatpush1.msra.mxu0 %v586
        %888 = vmatprep.subr.mxu0 %v591
        %889 = vmatpush1.msra.mxu0 %v590
        %890 = vmatprep.subr.mxu0 %v595
        %891 = vmatpush1.msra.mxu0 %v594
        %892 = vmatprep.subr.mxu0 %v599
        %893 = vmatpush1.msra.mxu0 %v598
        %894 = vmatprep.subr.mxu0 %v603
        %895 = vmatpush1.msra.mxu0 %v602
        %896 = vmatprep.subr.mxu0 %v607
        %897 = vmatpush1.msra.mxu0 %v606
        %898 = vmatprep.subr.mxu0 %v611
        %899 = vmatpush1.msra.mxu0 %v610
        %900 = vmatprep.subr.mxu0 %v615
        %901 = vmatpush1.msra.mxu0 %v614
        %902 = vmatprep.subr.mxu0 %v619
        %903 = vmatpush1.msra.mxu0 %v618
        %904 = vmatprep.subr.mxu0 %v623
        %905 = vmatpush1.msra.mxu0 %v622
        %906 = vmatprep.subr.mxu0 %v627
        %907 = vmatpush1.msra.mxu0 %v626
        %908 = vmatprep.subr.mxu0 %v631
        %909 = vmatpush1.msra.mxu0 %v630
        %910 = vmatprep.subr.mxu0 0.0
        %911 = vmatpush1.msra.mxu0 0.0
        %912 = vmatprep.subr.mxu0 0.0
        %913 = vmatpush1.msra.mxu0 0.0
        %914 = vmatprep.subr.mxu0 0.0
        %915 = vmatpush1.msra.mxu0 0.0
        %916 = vmatprep.subr.mxu0 0.0
        %917 = vmatpush1.msra.mxu0 0.0
        %918 = vmatprep.subr.mxu0 0.0
        %919 = vmatpush1.msra.mxu0 0.0
        %920 = vmatprep.subr.mxu0 0.0
        %921 = vmatpush1.msra.mxu0 0.0
        %922 = vmatprep.subr.mxu0 0.0
        %923 = vmatpush1.msra.mxu0 0.0
        %924 = vmatprep.subr.mxu0 0.0
        %925 = vmatpush1.msra.mxu0 0.0
        %926 = vmatprep.subr.mxu0 0.0
        %927 = vmatpush1.msra.mxu0 0.0
        %928 = vmatprep.subr.mxu0 0.0
        %929 = vmatpush1.msra.mxu0 0.0
        %930 = vmatprep.subr.mxu0 0.0
        %931 = vmatpush1.msra.mxu0 0.0
        %932 = vmatprep.subr.mxu0 0.0
        %933 = vmatpush1.msra.mxu0 0.0
        %934 = vmatprep.subr.mxu0 0.0
        %935 = vmatpush1.msra.mxu0 0.0
        %936 = vmatprep.subr.mxu0 0.0
        %937 = vmatpush1.msra.mxu0 0.0
        %938 = vmatprep.subr.mxu0 0.0
        %939 = vmatpush1.msra.mxu0 0.0
        %940 = vmatprep.subr.mxu0 0.0
        %941 = vmatpush1.msra.mxu0 0.0
        %942 = vmatprep.mubr.f32.mxu0 0.0
        %943 = vmatmul.mubr.f32.gmra.mrb[0].mxu0 %v801
        %v944 = vpop.f32.mrb[0].mxu0
        %v945 = vadd.f32 0.0, %v944
        %v946 = vpop.f32.mrb[0].mxu0
        %v947 = vadd.f32 0.0, %v946
        %948 = vdwg.mxu0
        %v949 = vadd.f32 %v803, %v874
        %v950 = vadd.f32 %v804, %v876
        %v951 = vadd.f32 %v805, %v945
        %v952 = vadd.f32 %v806, %v947
        %v953 = vmul.f32 %v949, 0.5
        %v954 = vtanh.pop %v953
        %v955 = vmul.f32 %v954, 0.5
        %v956 = vadd.f32 %v955, 0.5
        %v957 = vmul.f32 %v950, 0.5
        %v958 = vtanh.pop %v957
        %v959 = vmul.f32 %v958, 0.5
        %v960 = vadd.f32 %v959, 0.5
        %v961 = vtanh.pop %v951
        %v962 = vmul.f32 %v952, 0.5
        %v963 = vtanh.pop %v962
        %v964 = vmul.f32 %v963, 0.5
        %v965 = vadd.f32 %v964, 0.5
        %v966 = vmul.f32 %v960, %v799
        %v967 = vmul.f32 %v956, %v961
        %v968 = vadd.f32 %v966, %v967
        %v969 = vtanh.pop %v968
        %v970 = vmul.f32 %v965, %v969
        %s971 = scalar_lea.vmem [#allocation2], 64
        %v972 = vld [vmem:[%s971] sm:$0xff]
        %v973 = vld [vmem:[%s971 + $0x8] sm:$0xff]
        %v974 = vld [vmem:[%s971 + $0x10] sm:$0xff]
        %v975 = vld [vmem:[%s971 + $0x18] sm:$0xff]
        %976 = vmatprep.subr.mxu0 %v569
        %977 = vmatpush1.msra.mxu0 %v568
        %978 = vmatprep.subr.mxu0 %v573
        %979 = vmatpush1.msra.mxu0 %v572
        %980 = vmatprep.subr.mxu0 %v577
        %981 = vmatpush1.msra.mxu0 %v576
        %982 = vmatprep.subr.mxu0 %v581
        %983 = vmatpush1.msra.mxu0 %v580
        %984 = vmatprep.subr.mxu0 %v585
        %985 = vmatpush1.msra.mxu0 %v584
        %986 = vmatprep.subr.mxu0 %v589
        %987 = vmatpush1.msra.mxu0 %v588
        %988 = vmatprep.subr.mxu0 %v593
        %989 = vmatpush1.msra.mxu0 %v592
        %990 = vmatprep.subr.mxu0 %v597
        %991 = vmatpush1.msra.mxu0 %v596
        %992 = vmatprep.subr.mxu0 %v601
        %993 = vmatpush1.msra.mxu0 %v600
        %994 = vmatprep.subr.mxu0 %v605
        %995 = vmatpush1.msra.mxu0 %v604
        %996 = vmatprep.subr.mxu0 %v609
        %997 = vmatpush1.msra.mxu0 %v608
        %998 = vmatprep.subr.mxu0 %v613
        %999 = vmatpush1.msra.mxu0 %v612
        %1000 = vmatprep.subr.mxu0 %v617
        %1001 = vmatpush1.msra.mxu0 %v616
        %1002 = vmatprep.subr.mxu0 %v621
        %1003 = vmatpush1.msra.mxu0 %v620
        %1004 = vmatprep.subr.mxu0 %v625
        %1005 = vmatpush1.msra.mxu0 %v624
        %1006 = vmatprep.subr.mxu0 %v629
        %1007 = vmatpush1.msra.mxu0 %v628
        %1008 = vmatprep.subr.mxu0 0.0
        %1009 = vmatpush1.msra.mxu0 0.0
        %1010 = vmatprep.subr.mxu0 0.0
        %1011 = vmatpush1.msra.mxu0 0.0
        %1012 = vmatprep.subr.mxu0 0.0
        %1013 = vmatpush1.msra.mxu0 0.0
        %1014 = vmatprep.subr.mxu0 0.0
        %1015 = vmatpush1.msra.mxu0 0.0
        %1016 = vmatprep.subr.mxu0 0.0
        %1017 = vmatpush1.msra.mxu0 0.0
        %1018 = vmatprep.subr.mxu0 0.0
        %1019 = vmatpush1.msra.mxu0 0.0
        %1020 = vmatprep.subr.mxu0 0.0
        %1021 = vmatpush1.msra.mxu0 0.0
        %1022 = vmatprep.subr.mxu0 0.0
        %1023 = vmatpush1.msra.mxu0 0.0
        %1024 = vmatprep.subr.mxu0 0.0
        %1025 = vmatpush1.msra.mxu0 0.0
        %1026 = vmatprep.subr.mxu0 0.0
        %1027 = vmatpush1.msra.mxu0 0.0
        %1028 = vmatprep.subr.mxu0 0.0
        %1029 = vmatpush1.msra.mxu0 0.0
        %1030 = vmatprep.subr.mxu0 0.0
        %1031 = vmatpush1.msra.mxu0 0.0
        %1032 = vmatprep.subr.mxu0 0.0
        %1033 = vmatpush1.msra.mxu0 0.0
        %1034 = vmatprep.subr.mxu0 0.0
        %1035 = vmatpush1.msra.mxu0 0.0
        %1036 = vmatprep.subr.mxu0 0.0
        %1037 = vmatpush1.msra.mxu0 0.0
        %1038 = vmatprep.subr.mxu0 0.0
        %1039 = vmatpush1.msra.mxu0 0.0
        %1040 = vmatprep.mubr.f32.mxu0 0.0
        %1041 = vmatmul.mubr.f32.gmra.mrb[0].mxu0 %v970
        %v1042 = vpop.f32.mrb[0].mxu0
        %v1043 = vadd.f32 0.0, %v1042
        %v1044 = vpop.f32.mrb[0].mxu0
        %v1045 = vadd.f32 0.0, %v1044
        %1046 = vdwg.mxu0
        %1047 = vmatprep.subr.mxu0 %v571
        %1048 = vmatpush1.msra.mxu0 %v570
        %1049 = vmatprep.subr.mxu0 %v575
        %1050 = vmatpush1.msra.mxu0 %v574
        %1051 = vmatprep.subr.mxu0 %v579
        %1052 = vmatpush1.msra.mxu0 %v578
        %1053 = vmatprep.subr.mxu0 %v583
        %1054 = vmatpush1.msra.mxu0 %v582
        %1055 = vmatprep.subr.mxu0 %v587
        %1056 = vmatpush1.msra.mxu0 %v586
        %1057 = vmatprep.subr.mxu0 %v591
        %1058 = vmatpush1.msra.mxu0 %v590
        %1059 = vmatprep.subr.mxu0 %v595
        %1060 = vmatpush1.msra.mxu0 %v594
        %1061 = vmatprep.subr.mxu0 %v599
        %1062 = vmatpush1.msra.mxu0 %v598
        %1063 = vmatprep.subr.mxu0 %v603
        %1064 = vmatpush1.msra.mxu0 %v602
        %1065 = vmatprep.subr.mxu0 %v607
        %1066 = vmatpush1.msra.mxu0 %v606
        %1067 = vmatprep.subr.mxu0 %v611
        %1068 = vmatpush1.msra.mxu0 %v610
        %1069 = vmatprep.subr.mxu0 %v615
        %1070 = vmatpush1.msra.mxu0 %v614
        %1071 = vmatprep.subr.mxu0 %v619
        %1072 = vmatpush1.msra.mxu0 %v618
        %1073 = vmatprep.subr.mxu0 %v623
        %1074 = vmatpush1.msra.mxu0 %v622
        %1075 = vmatprep.subr.mxu0 %v627
        %1076 = vmatpush1.msra.mxu0 %v626
        %1077 = vmatprep.subr.mxu0 %v631
        %1078 = vmatpush1.msra.mxu0 %v630
        %1079 = vmatprep.subr.mxu0 0.0
        %1080 = vmatpush1.msra.mxu0 0.0
        %1081 = vmatprep.subr.mxu0 0.0
        %1082 = vmatpush1.msra.mxu0 0.0
        %1083 = vmatprep.subr.mxu0 0.0
        %1084 = vmatpush1.msra.mxu0 0.0
        %1085 = vmatprep.subr.mxu0 0.0
        %1086 = vmatpush1.msra.mxu0 0.0
        %1087 = vmatprep.subr.mxu0 0.0
        %1088 = vmatpush1.msra.mxu0 0.0
        %1089 = vmatprep.subr.mxu0 0.0
        %1090 = vmatpush1.msra.mxu0 0.0
        %1091 = vmatprep.subr.mxu0 0.0
        %1092 = vmatpush1.msra.mxu0 0.0
        %1093 = vmatprep.subr.mxu0 0.0
        %1094 = vmatpush1.msra.mxu0 0.0
        %1095 = vmatprep.subr.mxu0 0.0
        %1096 = vmatpush1.msra.mxu0 0.0
        %1097 = vmatprep.subr.mxu0 0.0
        %1098 = vmatpush1.msra.mxu0 0.0
        %1099 = vmatprep.subr.mxu0 0.0
        %1100 = vmatpush1.msra.mxu0 0.0
        %1101 = vmatprep.subr.mxu0 0.0
        %1102 = vmatpush1.msra.mxu0 0.0
        %1103 = vmatprep.subr.mxu0 0.0
        %1104 = vmatpush1.msra.mxu0 0.0
        %1105 = vmatprep.subr.mxu0 0.0
        %1106 = vmatpush1.msra.mxu0 0.0
        %1107 = vmatprep.subr.mxu0 0.0
        %1108 = vmatpush1.msra.mxu0 0.0
        %1109 = vmatprep.subr.mxu0 0.0
        %1110 = vmatpush1.msra.mxu0 0.0
        %1111 = vmatprep.mubr.f32.mxu0 0.0
        %1112 = vmatmul.mubr.f32.gmra.mrb[0].mxu0 %v970
        %v1113 = vpop.f32.mrb[0].mxu0
        %v1114 = vadd.f32 0.0, %v1113
        %v1115 = vpop.f32.mrb[0].mxu0
        %v1116 = vadd.f32 0.0, %v1115
        %1117 = vdwg.mxu0
        %v1118 = vadd.f32 %v972, %v1043
        %v1119 = vadd.f32 %v973, %v1045
        %v1120 = vadd.f32 %v974, %v1114
        %v1121 = vadd.f32 %v975, %v1116
        %v1122 = vmul.f32 %v1118, 0.5
        %v1123 = vtanh.pop %v1122
        %v1124 = vmul.f32 %v1123, 0.5
        %v1125 = vadd.f32 %v1124, 0.5
        %v1126 = vmul.f32 %v1119, 0.5
        %v1127 = vtanh.pop %v1126
        %v1128 = vmul.f32 %v1127, 0.5
        %v1129 = vadd.f32 %v1128, 0.5
        %v1130 = vtanh.pop %v1120
        %v1131 = vmul.f32 %v1121, 0.5
        %v1132 = vtanh.pop %v1131
        %v1133 = vmul.f32 %v1132, 0.5
        %v1134 = vadd.f32 %v1133, 0.5
        %v1135 = vmul.f32 %v1129, %v968
        %v1136 = vmul.f32 %v1125, %v1130
        %v1137 = vadd.f32 %v1135, %v1136
        %v1138 = vtanh.pop %v1137
        %v1139 = vmul.f32 %v1134, %v1138
        %s1140 = scalar_lea.vmem [#allocation2], 96
        %v1141 = vld [vmem:[%s1140] sm:$0xff]
        %v1142 = vld [vmem:[%s1140 + $0x8] sm:$0xff]
        %v1143 = vld [vmem:[%s1140 + $0x10] sm:$0xff]
        %v1144 = vld [vmem:[%s1140 + $0x18] sm:$0xff]
        %1145 = vmatprep.subr.mxu0 %v569
        %1146 = vmatpush1.msra.mxu0 %v568
        %1147 = vmatprep.subr.mxu0 %v573
        %1148 = vmatpush1.msra.mxu0 %v572
        %1149 = vmatprep.subr.mxu0 %v577
        %1150 = vmatpush1.msra.mxu0 %v576
        %1151 = vmatprep.subr.mxu0 %v581
        %1152 = vmatpush1.msra.mxu0 %v580
        %1153 = vmatprep.subr.mxu0 %v585
        %1154 = vmatpush1.msra.mxu0 %v584
        %1155 = vmatprep.subr.mxu0 %v589
        %1156 = vmatpush1.msra.mxu0 %v588
        %1157 = vmatprep.subr.mxu0 %v593
        %1158 = vmatpush1.msra.mxu0 %v592
        %1159 = vmatprep.subr.mxu0 %v597
        %1160 = vmatpush1.msra.mxu0 %v596
        %1161 = vmatprep.subr.mxu0 %v601
        %1162 = vmatpush1.msra.mxu0 %v600
        %1163 = vmatprep.subr.mxu0 %v605
        %1164 = vmatpush1.msra.mxu0 %v604
        %1165 = vmatprep.subr.mxu0 %v609
        %1166 = vmatpush1.msra.mxu0 %v608
        %1167 = vmatprep.subr.mxu0 %v613
        %1168 = vmatpush1.msra.mxu0 %v612
        %1169 = vmatprep.subr.mxu0 %v617
        %1170 = vmatpush1.msra.mxu0 %v616
        %1171 = vmatprep.subr.mxu0 %v621
        %1172 = vmatpush1.msra.mxu0 %v620
        %1173 = vmatprep.subr.mxu0 %v625
        %1174 = vmatpush1.msra.mxu0 %v624
        %1175 = vmatprep.subr.mxu0 %v629
        %1176 = vmatpush1.msra.mxu0 %v628
        %1177 = vmatprep.subr.mxu0 0.0
        %1178 = vmatpush1.msra.mxu0 0.0
        %1179 = vmatprep.subr.mxu0 0.0
        %1180 = vmatpush1.msra.mxu0 0.0
        %1181 = vmatprep.subr.mxu0 0.0
        %1182 = vmatpush1.msra.mxu0 0.0
        %1183 = vmatprep.subr.mxu0 0.0
        %1184 = vmatpush1.msra.mxu0 0.0
        %1185 = vmatprep.subr.mxu0 0.0
        %1186 = vmatpush1.msra.mxu0 0.0
        %1187 = vmatprep.subr.mxu0 0.0
        %1188 = vmatpush1.msra.mxu0 0.0
        %1189 = vmatprep.subr.mxu0 0.0
        %1190 = vmatpush1.msra.mxu0 0.0
        %1191 = vmatprep.subr.mxu0 0.0
        %1192 = vmatpush1.msra.mxu0 0.0
        %1193 = vmatprep.subr.mxu0 0.0
        %1194 = vmatpush1.msra.mxu0 0.0
        %1195 = vmatprep.subr.mxu0 0.0
        %1196 = vmatpush1.msra.mxu0 0.0
        %1197 = vmatprep.subr.mxu0 0.0
        %1198 = vmatpush1.msra.mxu0 0.0
        %1199 = vmatprep.subr.mxu0 0.0
        %1200 = vmatpush1.msra.mxu0 0.0
        %1201 = vmatprep.subr.mxu0 0.0
        %1202 = vmatpush1.msra.mxu0 0.0
        %1203 = vmatprep.subr.mxu0 0.0
        %1204 = vmatpush1.msra.mxu0 0.0
        %1205 = vmatprep.subr.mxu0 0.0
        %1206 = vmatpush1.msra.mxu0 0.0
        %1207 = vmatprep.subr.mxu0 0.0
        %1208 = vmatpush1.msra.mxu0 0.0
        %1209 = vmatprep.mubr.f32.mxu0 0.0
        %1210 = vmatmul.mubr.f32.gmra.mrb[0].mxu0 %v1139
        %v1211 = vpop.f32.mrb[0].mxu0
        %v1212 = vadd.f32 0.0, %v1211
        %v1213 = vpop.f32.mrb[0].mxu0
        %v1214 = vadd.f32 0.0, %v1213
        %1215 = vdwg.mxu0
        %1216 = vmatprep.subr.mxu0 %v571
        %1217 = vmatpush1.msra.mxu0 %v570
        %1218 = vmatprep.subr.mxu0 %v575
        %1219 = vmatpush1.msra.mxu0 %v574
        %1220 = vmatprep.subr.mxu0 %v579
        %1221 = vmatpush1.msra.mxu0 %v578
        %1222 = vmatprep.subr.mxu0 %v583
        %1223 = vmatpush1.msra.mxu0 %v582
        %1224 = vmatprep.subr.mxu0 %v587
        %1225 = vmatpush1.msra.mxu0 %v586
        %1226 = vmatprep.subr.mxu0 %v591
        %1227 = vmatpush1.msra.mxu0 %v590
        %1228 = vmatprep.subr.mxu0 %v595
        %1229 = vmatpush1.msra.mxu0 %v594
        %1230 = vmatprep.subr.mxu0 %v599
        %1231 = vmatpush1.msra.mxu0 %v598
        %1232 = vmatprep.subr.mxu0 %v603
        %1233 = vmatpush1.msra.mxu0 %v602
        %1234 = vmatprep.subr.mxu0 %v607
        %1235 = vmatpush1.msra.mxu0 %v606
        %1236 = vmatprep.subr.mxu0 %v611
        %1237 = vmatpush1.msra.mxu0 %v610
        %1238 = vmatprep.subr.mxu0 %v615
        %1239 = vmatpush1.msra.mxu0 %v614
        %1240 = vmatprep.subr.mxu0 %v619
        %1241 = vmatpush1.msra.mxu0 %v618
        %1242 = vmatprep.subr.mxu0 %v623
        %1243 = vmatpush1.msra.mxu0 %v622
        %1244 = vmatprep.subr.mxu0 %v627
        %1245 = vmatpush1.msra.mxu0 %v626
        %1246 = vmatprep.subr.mxu0 %v631
        %1247 = vmatpush1.msra.mxu0 %v630
        %1248 = vmatprep.subr.mxu0 0.0
        %1249 = vmatpush1.msra.mxu0 0.0
        %1250 = vmatprep.subr.mxu0 0.0
        %1251 = vmatpush1.msra.mxu0 0.0
        %1252 = vmatprep.subr.mxu0 0.0
        %1253 = vmatpush1.msra.mxu0 0.0
        %1254 = vmatprep.subr.mxu0 0.0
        %1255 = vmatpush1.msra.mxu0 0.0
        %1256 = vmatprep.subr.mxu0 0.0
        %1257 = vmatpush1.msra.mxu0 0.0
        %1258 = vmatprep.subr.mxu0 0.0
        %1259 = vmatpush1.msra.mxu0 0.0
        %1260 = vmatprep.subr.mxu0 0.0
        %1261 = vmatpush1.msra.mxu0 0.0
        %1262 = vmatprep.subr.mxu0 0.0
        %1263 = vmatpush1.msra.mxu0 0.0
        %1264 = vmatprep.subr.mxu0 0.0
        %1265 = vmatpush1.msra.mxu0 0.0
        %1266 = vmatprep.subr.mxu0 0.0
        %1267 = vmatpush1.msra.mxu0 0.0
        %1268 = vmatprep.subr.mxu0 0.0
        %1269 = vmatpush1.msra.mxu0 0.0
        %1270 = vmatprep.subr.mxu0 0.0
        %1271 = vmatpush1.msra.mxu0 0.0
        %1272 = vmatprep.subr.mxu0 0.0
        %1273 = vmatpush1.msra.mxu0 0.0
        %1274 = vmatprep.subr.mxu0 0.0
        %1275 = vmatpush1.msra.mxu0 0.0
        %1276 = vmatprep.subr.mxu0 0.0
        %1277 = vmatpush1.msra.mxu0 0.0
        %1278 = vmatprep.subr.mxu0 0.0
        %1279 = vmatpush1.msra.mxu0 0.0
        %1280 = vmatprep.mubr.f32.mxu0 0.0
        %1281 = vmatmul.mubr.f32.gmra.mrb[0].mxu0 %v1139
        %v1282 = vpop.f32.mrb[0].mxu0
        %v1283 = vadd.f32 0.0, %v1282
        %v1284 = vpop.f32.mrb[0].mxu0
        %v1285 = vadd.f32 0.0, %v1284
        %1286 = vdwg.mxu0
        %v1287 = vadd.f32 %v1141, %v1212
        %v1288 = vadd.f32 %v1142, %v1214
        %v1289 = vadd.f32 %v1143, %v1283
        %v1290 = vadd.f32 %v1144, %v1285
        %v1291 = vmul.f32 %v1287, 0.5
        %v1292 = vtanh.pop %v1291
        %v1293 = vmul.f32 %v1292, 0.5
        %v1294 = vadd.f32 %v1293, 0.5
        %v1295 = vmul.f32 %v1288, 0.5
        %v1296 = vtanh.pop %v1295
        %v1297 = vmul.f32 %v1296, 0.5
        %v1298 = vadd.f32 %v1297, 0.5
        %v1299 = vtanh.pop %v1289
        %v1300 = vmul.f32 %v1290, 0.5
        %v1301 = vtanh.pop %v1300
        %v1302 = vmul.f32 %v1301, 0.5
        %v1303 = vadd.f32 %v1302, 0.5
        %v1304 = vmul.f32 %v1298, %v1137
        %v1305 = vmul.f32 %v1294, %v1299
        %v1306 = vadd.f32 %v1304, %v1305
        %v1307 = vtanh.pop %v1306
        %v1308 = vmul.f32 %v1303, %v1307
        %1309 = vst [vmem:[#allocation3] sm:$0xff] %v1308
        %1310 = vst [vmem:[#allocation4] sm:$0xff] %v1306
        %p1311 = scmp.eq.s32.totalorder %s25, 1
        // Predicated region
        $region57: #{tpu_custom_call.1} parent=43 // pred_check
          %p1312 = pneg %p1311
        $region58: #{tpu_custom_call.1} parent=43 // pred_check_branch
          %1314 = sbr.rel (%p1312) target = $region60
        $region59: #{tpu_custom_call.1} parent=43 // pred_region
          %v1315 = vld [vmem:[#allocation8] sm:$0xff]
          %v1316 = vld [vmem:[#allocation8 + $0x8] sm:$0xff]
          %v1317 = vld [vmem:[#allocation8 + $0x10] sm:$0xff]
          %v1318 = vld [vmem:[#allocation8 + $0x18] sm:$0xff]
          %v1319 = vld [vmem:[#allocation8 + $0x20] sm:$0xff]
          %v1320 = vld [vmem:[#allocation8 + $0x28] sm:$0xff]
          %v1321 = vld [vmem:[#allocation8 + $0x30] sm:$0xff]
          %v1322 = vld [vmem:[#allocation8 + $0x38] sm:$0xff]
          %v1323 = vld [vmem:[#allocation8 + $0x40] sm:$0xff]
          %v1324 = vld [vmem:[#allocation8 + $0x48] sm:$0xff]
          %v1325 = vld [vmem:[#allocation8 + $0x50] sm:$0xff]
          %v1326 = vld [vmem:[#allocation8 + $0x58] sm:$0xff]
          %v1327 = vld [vmem:[#allocation8 + $0x60] sm:$0xff]
          %v1328 = vld [vmem:[#allocation8 + $0x68] sm:$0xff]
          %v1329 = vld [vmem:[#allocation8 + $0x70] sm:$0xff]
          %v1330 = vld [vmem:[#allocation8 + $0x78] sm:$0xff]
          %v1331 = vld [vmem:[%s5] sm:$0x1]
          %v1333 = vlaneseq
          %v1334 = vshrl.u32 %v1333, 7
          %v1335 = vsub.s32 0, %v1334
          %v1336 = vrot.slane %v1331, %v1335
          %1338 = vmatprep.subr.mxu0 0.0
          %1339 = vmatpush1.msra.mxu0 %v1315
          %1340 = vmatprep.subr.mxu0 0.0
          %1341 = vmatpush1.msra.mxu0 %v1316
          %1342 = vmatprep.subr.mxu0 0.0
          %1343 = vmatpush1.msra.mxu0 %v1317
          %1344 = vmatprep.subr.mxu0 0.0
          %1345 = vmatpush1.msra.mxu0 %v1318
          %1346 = vmatprep.subr.mxu0 0.0
          %1347 = vmatpush1.msra.mxu0 %v1319
          %1348 = vmatprep.subr.mxu0 0.0
          %1349 = vmatpush1.msra.mxu0 %v1320
          %1350 = vmatprep.subr.mxu0 0.0
          %1351 = vmatpush1.msra.mxu0 %v1321
          %1352 = vmatprep.subr.mxu0 0.0
          %1353 = vmatpush1.msra.mxu0 %v1322
          %1354 = vmatprep.subr.mxu0 0.0
          %1355 = vmatpush1.msra.mxu0 %v1323
          %1356 = vmatprep.subr.mxu0 0.0
          %1357 = vmatpush1.msra.mxu0 %v1324
          %1358 = vmatprep.subr.mxu0 0.0
          %1359 = vmatpush1.msra.mxu0 %v1325
          %1360 = vmatprep.subr.mxu0 0.0
          %1361 = vmatpush1.msra.mxu0 %v1326
          %1362 = vmatprep.subr.mxu0 0.0
          %1363 = vmatpush1.msra.mxu0 %v1327
          %1364 = vmatprep.subr.mxu0 0.0
          %1365 = vmatpush1.msra.mxu0 %v1328
          %1366 = vmatprep.subr.mxu0 0.0
          %1367 = vmatpush1.msra.mxu0 %v1329
          %1368 = vmatprep.subr.mxu0 0.0
          %1369 = vmatpush1.msra.mxu0 %v1330
          %1370 = vmatprep.subr.mxu0 0.0
          %1371 = vmatpush1.msra.mxu0 0.0
          %1372 = vmatprep.subr.mxu0 0.0
          %1373 = vmatpush1.msra.mxu0 0.0
          %1374 = vmatprep.subr.mxu0 0.0
          %1375 = vmatpush1.msra.mxu0 0.0
          %1376 = vmatprep.subr.mxu0 0.0
          %1377 = vmatpush1.msra.mxu0 0.0
          %1378 = vmatprep.subr.mxu0 0.0
          %1379 = vmatpush1.msra.mxu0 0.0
          %1380 = vmatprep.subr.mxu0 0.0
          %1381 = vmatpush1.msra.mxu0 0.0
          %1382 = vmatprep.subr.mxu0 0.0
          %1383 = vmatpush1.msra.mxu0 0.0
          %1384 = vmatprep.subr.mxu0 0.0
          %1385 = vmatpush1.msra.mxu0 0.0
          %1386 = vmatprep.subr.mxu0 0.0
          %1387 = vmatpush1.msra.mxu0 0.0
          %1388 = vmatprep.subr.mxu0 0.0
          %1389 = vmatpush1.msra.mxu0 0.0
          %1390 = vmatprep.subr.mxu0 0.0
          %1391 = vmatpush1.msra.mxu0 0.0
          %1392 = vmatprep.subr.mxu0 0.0
          %1393 = vmatpush1.msra.mxu0 0.0
          %1394 = vmatprep.subr.mxu0 0.0
          %1395 = vmatpush1.msra.mxu0 0.0
          %1396 = vmatprep.subr.mxu0 0.0
          %1397 = vmatpush1.msra.mxu0 0.0
          %1398 = vmatprep.subr.mxu0 0.0
          %1399 = vmatpush1.msra.mxu0 0.0
          %1400 = vmatprep.subr.mxu0 0.0
          %1401 = vmatpush1.msra.mxu0 0.0
          %1402 = vmatprep.mubr.f32.mxu0 0.0
          %1403 = vmatmul.mubr.f32.gmra.mrb[0].mxu0 %v1308
          %v1404 = vpop.f32.mrb[0].mxu0
          %v1405 = vadd.f32 %v1336, %v1404
          %v1406 = vpop.f32.mrb[0].mxu0
          %1407 = vdwg.mxu0
          %1408 = vst [vmem:[#allocation10] sm:$0xff] %v1405
        $region60: #{tpu_custom_call.1} parent=43 // pred_fallthru
          _
        // Predicated region
        $region61: #{tpu_custom_call.1} parent=43 // pred_check
          %p1409 = pneg %p183
        $region62: #{tpu_custom_call.1} parent=43 // pred_check_branch
          %1411 = sbr.rel (%p1409) target = $region64
        $region63: #{tpu_custom_call.1} parent=43 // pred_region
          %s1413 = ssub.s32 128, 128
          %1414 = vsyncadd [#allocation7], %s1413
          %s1415 = smul.addr %s24, 128
          %s1416 = scalar_lea.hbm %s6, %s1415
          %s1418 = sshll.u32 [#allocation10], 4
          %s1419 = int_to_ptr.vmem [resolvable:$true] %s1418
          %1421 = dma.vmem_to_hbm [thread:$0]  %s1419, 128, %s1416, [#allocation7]
        $region64: #{tpu_custom_call.1} parent=43 // pred_fallthru
          _
        // Predicated region
        $region65: #{tpu_custom_call.1} parent=43 // pred_check
          %p1422 = pneg %p183
        $region66: #{tpu_custom_call.1} parent=43 // pred_check_branch
          %1424 = sbr.rel (%p1422) target = $region68
        $region67: #{tpu_custom_call.1} parent=43 // pred_region
          %1425 = dma.done [#allocation7], 128
        $region68: #{tpu_custom_call.1} parent=43 // pred_fallthru
          _
      $region44: #{tpu_custom_call.1} parent=5 // pred_fallthru
        _
      %p1426 = scmp.le.s32.totalorder 2, %s15
      // Predicated region
      $region69: #{tpu_custom_call.1} parent=5 // pred_check
        %p1427 = pneg %p1426
      $region70: #{tpu_custom_call.1} parent=5 // pred_check_branch
        %1429 = sbr.rel (%p1427) target = $region72
      $region71: #{tpu_custom_call.1} parent=5 // pred_region
        %s1430 = ssub.s32 %s15, 2
      $region72: #{tpu_custom_call.1} parent=5 // pred_fallthru
        _
    $region6: #{tpu_custom_call.1} parent=1 // loop_footer
      %s19 = sadd.s32 1, %s15
    $region7: #{tpu_custom_call.1} parent=1 // loop_footer_branch
      %14 = sbr.rel target = $region3
    $region8: #{tpu_custom_call.1} parent=1 // loop_exit
      _
    %1431 = vsyncpa [#allocation6], 1
    %s1432 = scalar_lea.sflag [#allocation6], 1
    %1433 = vsyncpa %s1432, 1
    %1434 = vsyncpa [#allocation9], 1
    %1435 = vsyncpa [#allocation7], 1
    %s1436 = scalar_lea.sflag [#allocation7], 1
    %1437 = vsyncpa %s1436, 1

</llo_original>
